<compile_context>
chip_gen: v7x
topology: tpu7x:2x2x1
jax: 0.10.0
libtpu: 0.0.40
codegen_flags: <defaults>
</compile_context>

<pallas_src>
import functools

import jax
import jax.numpy as jnp
from jax.experimental import pallas as pl
from jax.experimental.pallas import tpu as pltpu


def _round_up(x, m):
    return (x + m - 1) // m * m


def _conv3x3s2_bn_lrelu_kernel(ee_ref, eo_ref, oe_ref, oo_ref, w_ref,
                               scale_ref, shift_ref, o_ref, *, m, wc):
    # ee/eo/oe/oo_ref: ((th+2)*Wc, Cin) bf16 parity-phase slabs, spatially
    #                  flattened row-major with row stride Wc.
    # w_ref:           (9, Cin, Cout_pad) bf16 folded conv weight (tap kh*3+kw).
    # scale/shift_ref: (1, Cout_pad) f32 fused BatchNorm affine.
    # o_ref:           (m, Cout_pad) f32, m = th*Wc output pixels (last column
    #                  of each row is junk and sliced off in the wrapper).
    #
    # Tap (kh, kw) of the stride-2 conv is the contiguous (m, Cin) window at
    # flat offset (kh//2)*Wc + (kw//2) of the phase selected by (kh%2, kw%2).
    phases = ((ee_ref, eo_ref), (oe_ref, oo_ref))
    acc = None
    for kh in range(3):
        for kw in range(3):
            ref = phases[kh % 2][kw % 2]
            off = (kh // 2) * wc + (kw // 2)
            lhs = ref[off:off + m, :]                      # (m, Cin) bf16
            part = jnp.dot(lhs, w_ref[kh * 3 + kw],
                           preferred_element_type=jnp.float32)
            acc = part if acc is None else acc + part
    y = acc * scale_ref[...] + shift_ref[...]              # fused BN (inference)
    y = jnp.where(y >= 0, y, 0.1 * y)                      # LeakyReLU(0.1)
    o_ref[...] = y.astype(o_ref.dtype)


def downsample_forward(x, w_oihw, conv_bias, gamma, beta, run_mean, run_var,
                       *, eps=1e-5, target_rows=512):
    """x: (N, Cin, H, W) f32 -> (N, Cout, Ho, Wo) f32."""
    N, Cin, H, W = x.shape
    Cout = w_oihw.shape[0]
    Ho = (H + 2 - 3) // 2 + 1
    Wo = (W + 2 - 3) // 2 + 1

    # ---- tiling: th output rows per grid step (~target_rows output pixels) --
    th = max(1, min(Ho, max(1, target_rows // max(Wo, 1))))
    n_t = int(pl.cdiv(Ho, th))
    Ho_pad = n_t * th
    Wc = Wo + 1                        # +1 junk output column -> uniform stride
    m_tile = th * Wc
    L = (th + 2) * Wc                  # flattened phase-slab length per tile
    Cout_pad = _round_up(Cout, 128)    # lane-dense output stores

    # ---- glue (layout only): NCHW -> NHWC bf16, zero pad, phase split -------
    x_nhwc = jnp.transpose(x, (0, 2, 3, 1)).astype(jnp.bfloat16)
    Hp = max(H + 2, 2 * Ho_pad + 3)    # extra zero rows only feed junk outputs
    Wp = max(W + 2, 2 * Wo + 2)
    x_pad = jnp.pad(x_nhwc, ((0, 0), (1, Hp - H - 1), (1, Wp - W - 1), (0, 0)))

    def phase(row_start, col_start):
        p = x_pad[:, row_start::2, col_start::2][:, :, :Wc]
        rows = p.shape[1]
        if rows >= Ho_pad + 2:
            p = p[:, :Ho_pad + 2]
        else:
            p = jnp.pad(p, ((0, 0), (0, Ho_pad + 2 - rows), (0, 0), (0, 0)))
        return p                                        # (N, Ho_pad+2, Wc, Cin)

    def tile_phase(p):
        # per-tile row window [t*th, t*th + th + 2), then flatten (rows, cols)
        body = p[:, :Ho_pad].reshape(N, n_t, th, Wc, Cin)
        h0 = p[:, th:Ho_pad + 1:th][:, :, None]
        h1 = p[:, th + 1:Ho_pad + 2:th][:, :, None]
        t5 = jnp.concatenate([body, h0, h1], axis=2)    # (N, n_t, th+2, Wc, Cin)
        return t5.reshape(N, n_t, L, Cin)

    EE = tile_phase(phase(0, 0))
    EO = tile_phase(phase(0, 1))
    OE = tile_phase(phase(1, 0))
    OO = tile_phase(phase(1, 1))

    # ---- fold conv weight to (9, Cin, Cout_pad) bf16; fuse bias + BN --------
    w9 = jnp.transpose(w_oihw, (2, 3, 1, 0)).reshape(9, Cin, Cout)
    w9 = jnp.pad(w9, ((0, 0), (0, 0), (0, Cout_pad - Cout))).astype(jnp.bfloat16)
    scale = (gamma / jnp.sqrt(run_var + eps)).astype(jnp.float32)
    shift = ((conv_bias - run_mean) * scale + beta).astype(jnp.float32)
    scale = jnp.pad(scale, (0, Cout_pad - Cout)).reshape(1, Cout_pad)
    shift = jnp.pad(shift, (0, Cout_pad - Cout)).reshape(1, Cout_pad)

    kernel = functools.partial(_conv3x3s2_bn_lrelu_kernel, m=m_tile, wc=Wc)
    phase_spec = pl.BlockSpec((None, None, L, Cin), lambda n, t: (n, t, 0, 0))

    out_tiles = pl.pallas_call(
        kernel,
        out_shape=jax.ShapeDtypeStruct((N * n_t, m_tile, Cout_pad), jnp.float32),
        grid_spec=pltpu.PrefetchScalarGridSpec(
            num_scalar_prefetch=0,
            grid=(N, n_t),
            in_specs=[
                phase_spec,  # EE
                phase_spec,  # EO
                phase_spec,  # OE
                phase_spec,  # OO
                # grid-invariant blocks (constant index_map -> fetched once)
                pl.BlockSpec((9, Cin, Cout_pad), lambda n, t: (0, 0, 0)),
                pl.BlockSpec((1, Cout_pad), lambda n, t: (0, 0)),
                pl.BlockSpec((1, Cout_pad), lambda n, t: (0, 0)),
            ],
            out_specs=pl.BlockSpec((None, m_tile, Cout_pad),
                                   lambda n, t: (n * n_t + t, 0, 0)),
        ),
        compiler_params=pltpu.CompilerParams(
            dimension_semantics=("parallel", "parallel")),
    )(EE, EO, OE, OO, w9, scale, shift)

    out = out_tiles.reshape(N, Ho_pad, Wc, Cout_pad)[:, :Ho, :Wo, :Cout]
    # TODO(synk): returning NHWC directly would save this extra HBM pass if the
    # downstream consumer accepted channels-last.
    return jnp.transpose(out, (0, 3, 1, 2)).astype(x.dtype)


def _reference(x, w_oihw, conv_bias, gamma, beta, run_mean, run_var, eps=1e-5):
    y = jax.lax.conv_general_dilated(
        x, w_oihw, window_strides=(2, 2), padding=((1, 1), (1, 1)),
        dimension_numbers=("NCHW", "OIHW", "NCHW"))
    y = y + conv_bias[None, :, None, None]
    y = (y - run_mean[None, :, None, None]) / jnp.sqrt(
        run_var[None, :, None, None] + eps)
    y = y * gamma[None, :, None, None] + beta[None, :, None, None]
    return jnp.where(y >= 0, y, 0.1 * y)


if __name__ == "__main__":
    key = jax.random.PRNGKey(0)
    N, Cin, H, W = 2, 4, 16, 16
    Cout = 8

    k_x, k_w, k_b, k_g, k_be, k_m, k_v = jax.random.split(key, 7)
    x = jax.random.normal(k_x, (N, Cin, H, W), dtype=jnp.float32)
    w_oihw = jax.random.normal(k_w, (Cout, Cin, 3, 3), dtype=jnp.float32) * 0.1
    conv_bias = jax.random.normal(k_b, (Cout,), dtype=jnp.float32) * 0.1
    gamma = 1.0 + 0.1 * jax.random.normal(k_g, (Cout,), dtype=jnp.float32)
    beta = 0.1 * jax.random.normal(k_be, (Cout,), dtype=jnp.float32)
    run_mean = 0.1 * jax.random.normal(k_m, (Cout,), dtype=jnp.float32)
    run_var = jnp.abs(1.0 + 0.1 * jax.random.normal(k_v, (Cout,), dtype=jnp.float32))

    fwd = jax.jit(downsample_forward)
    out = jax.block_until_ready(
        fwd(x, w_oihw, conv_bias, gamma, beta, run_mean, run_var))

    ref = _reference(x, w_oihw, conv_bias, gamma, beta, run_mean, run_var)
    assert out.shape == (N, Cout, H // 2, W // 2), out.shape
    # bf16 matmul inputs with f32 accumulation -> looser tolerance than pure f32.
    assert bool(jnp.allclose(out, ref, atol=5e-2, rtol=5e-2)), float(
        jnp.max(jnp.abs(out - ref)))

    # TODO(synk): PyTorch BatchNorm2d in train mode uses batch statistics; this
    # kernel fuses inference-mode (running-stats) BN into the matmul epilogue.
    print("KERNEL_OK")
</pallas_src>

<mosaic_0001>
module attributes {stable_mosaic.version = 11 : i64} {
  func.func @_conv3x3s2_bn_lrelu_kernel(%arg0: i32, %arg1: i32, %arg2: memref<1x1x90x4xbf16, #tpu.memory_space<vmem>>, %arg3: memref<1x1x90x4xbf16, #tpu.memory_space<vmem>>, %arg4: memref<1x1x90x4xbf16, #tpu.memory_space<vmem>>, %arg5: memref<1x1x90x4xbf16, #tpu.memory_space<vmem>>, %arg6: memref<9x4x128xbf16, #tpu.memory_space<vmem>>, %arg7: memref<1x128xf32, #tpu.memory_space<vmem>>, %arg8: memref<1x128xf32, #tpu.memory_space<vmem>>, %arg9: memref<1x72x128xf32, #tpu.memory_space<vmem>>) attributes {dimension_semantics = [#tpu.dimension_semantics<parallel>, #tpu.dimension_semantics<parallel>], iteration_bounds = array<i64: 2, 1>, scalar_prefetch = 0 : i64, scratch_operands = 0 : i64, tpu.core_type = #tpu.core_type<tc>, window_params = [{transform_indices = @transform_0, window_bounds = array<i64: 1, 1, 90, 4>}, {transform_indices = @transform_1, window_bounds = array<i64: 1, 1, 90, 4>}, {transform_indices = @transform_2, window_bounds = array<i64: 1, 1, 90, 4>}, {transform_indices = @transform_3, window_bounds = array<i64: 1, 1, 90, 4>}, {pipeline_mode = #tpu.pipeline_mode<synchronous>, transform_indices = @transform_4, window_bounds = array<i64: 9, 4, 128>}, {pipeline_mode = #tpu.pipeline_mode<synchronous>, transform_indices = @transform_5, window_bounds = array<i64: 1, 128>}, {pipeline_mode = #tpu.pipeline_mode<synchronous>, transform_indices = @transform_6, window_bounds = array<i64: 1, 128>}, {transform_indices = @transform_7, window_bounds = array<i64: 1, 72, 128>}]} {
    %c0 = arith.constant 0 : index
    %c0_0 = arith.constant 0 : index
    %c0_1 = arith.constant 0 : index
    %c0_2 = arith.constant 0 : index
    %0 = vector.load %arg2[%c0, %c0_0, %c0_1, %c0_2] : memref<1x1x90x4xbf16, #tpu.memory_space<vmem>>, vector<1x1x72x4xbf16>
    %1 = vector.shape_cast %0 : vector<1x1x72x4xbf16> to vector<72x4xbf16>
    %c0_3 = arith.constant 0 : index
    %c0_4 = arith.constant 0 : index
    %c0_5 = arith.constant 0 : index
    %2 = vector.load %arg6[%c0_3, %c0_4, %c0_5] : memref<9x4x128xbf16, #tpu.memory_space<vmem>>, vector<1x4x128xbf16>
    %3 = vector.shape_cast %2 : vector<1x4x128xbf16> to vector<4x128xbf16>
    %cst = arith.constant dense<0.000000e+00> : vector<72x128xf32>
    %4 = tpu.matmul %1, %3, %cst {dimension_numbers = #tpu.dot_dimension_numbers<[1], [0], [0], [1], [0, 0, 1, 1], [], []>} : vector<72x4xbf16>, vector<4x128xbf16>, vector<72x128xf32> -> vector<72x128xf32>
    %c0_6 = arith.constant 0 : index
    %c0_7 = arith.constant 0 : index
    %c0_8 = arith.constant 0 : index
    %c0_9 = arith.constant 0 : index
    %5 = vector.load %arg3[%c0_6, %c0_7, %c0_8, %c0_9] : memref<1x1x90x4xbf16, #tpu.memory_space<vmem>>, vector<1x1x72x4xbf16>
    %6 = vector.shape_cast %5 : vector<1x1x72x4xbf16> to vector<72x4xbf16>
    %c1 = arith.constant 1 : index
    %c0_10 = arith.constant 0 : index
    %c0_11 = arith.constant 0 : index
    %7 = vector.load %arg6[%c1, %c0_10, %c0_11] : memref<9x4x128xbf16, #tpu.memory_space<vmem>>, vector<1x4x128xbf16>
    %8 = vector.shape_cast %7 : vector<1x4x128xbf16> to vector<4x128xbf16>
    %cst_12 = arith.constant dense<0.000000e+00> : vector<72x128xf32>
    %9 = tpu.matmul %6, %8, %cst_12 {dimension_numbers = #tpu.dot_dimension_numbers<[1], [0], [0], [1], [0, 0, 1, 1], [], []>} : vector<72x4xbf16>, vector<4x128xbf16>, vector<72x128xf32> -> vector<72x128xf32>
    %10 = arith.addf %4, %9 : vector<72x128xf32>
    %c0_13 = arith.constant 0 : index
    %c0_14 = arith.constant 0 : index
    %c1_15 = arith.constant 1 : index
    %c0_16 = arith.constant 0 : index
    %11 = vector.load %arg2[%c0_13, %c0_14, %c1_15, %c0_16] : memref<1x1x90x4xbf16, #tpu.memory_space<vmem>>, vector<1x1x72x4xbf16>
    %12 = vector.shape_cast %11 : vector<1x1x72x4xbf16> to vector<72x4xbf16>
    %c2 = arith.constant 2 : index
    %c0_17 = arith.constant 0 : index
    %c0_18 = arith.constant 0 : index
    %13 = vector.load %arg6[%c2, %c0_17, %c0_18] : memref<9x4x128xbf16, #tpu.memory_space<vmem>>, vector<1x4x128xbf16>
    %14 = vector.shape_cast %13 : vector<1x4x128xbf16> to vector<4x128xbf16>
    %cst_19 = arith.constant dense<0.000000e+00> : vector<72x128xf32>
    %15 = tpu.matmul %12, %14, %cst_19 {dimension_numbers = #tpu.dot_dimension_numbers<[1], [0], [0], [1], [0, 0, 1, 1], [], []>} : vector<72x4xbf16>, vector<4x128xbf16>, vector<72x128xf32> -> vector<72x128xf32>
    %16 = arith.addf %10, %15 : vector<72x128xf32>
    %c0_20 = arith.constant 0 : index
    %c0_21 = arith.constant 0 : index
    %c0_22 = arith.constant 0 : index
    %c0_23 = arith.constant 0 : index
    %17 = vector.load %arg4[%c0_20, %c0_21, %c0_22, %c0_23] : memref<1x1x90x4xbf16, #tpu.memory_space<vmem>>, vector<1x1x72x4xbf16>
    %18 = vector.shape_cast %17 : vector<1x1x72x4xbf16> to vector<72x4xbf16>
    %c3 = arith.constant 3 : index
    %c0_24 = arith.constant 0 : index
    %c0_25 = arith.constant 0 : index
    %19 = vector.load %arg6[%c3, %c0_24, %c0_25] : memref<9x4x128xbf16, #tpu.memory_space<vmem>>, vector<1x4x128xbf16>
    %20 = vector.shape_cast %19 : vector<1x4x128xbf16> to vector<4x128xbf16>
    %cst_26 = arith.constant dense<0.000000e+00> : vector<72x128xf32>
    %21 = tpu.matmul %18, %20, %cst_26 {dimension_numbers = #tpu.dot_dimension_numbers<[1], [0], [0], [1], [0, 0, 1, 1], [], []>} : vector<72x4xbf16>, vector<4x128xbf16>, vector<72x128xf32> -> vector<72x128xf32>
    %22 = arith.addf %16, %21 : vector<72x128xf32>
    %c0_27 = arith.constant 0 : index
    %c0_28 = arith.constant 0 : index
    %c0_29 = arith.constant 0 : index
    %c0_30 = arith.constant 0 : index
    %23 = vector.load %arg5[%c0_27, %c0_28, %c0_29, %c0_30] : memref<1x1x90x4xbf16, #tpu.memory_space<vmem>>, vector<1x1x72x4xbf16>
    %24 = vector.shape_cast %23 : vector<1x1x72x4xbf16> to vector<72x4xbf16>
    %c4 = arith.constant 4 : index
    %c0_31 = arith.constant 0 : index
    %c0_32 = arith.constant 0 : index
    %25 = vector.load %arg6[%c4, %c0_31, %c0_32] : memref<9x4x128xbf16, #tpu.memory_space<vmem>>, vector<1x4x128xbf16>
    %26 = vector.shape_cast %25 : vector<1x4x128xbf16> to vector<4x128xbf16>
    %cst_33 = arith.constant dense<0.000000e+00> : vector<72x128xf32>
    %27 = tpu.matmul %24, %26, %cst_33 {dimension_numbers = #tpu.dot_dimension_numbers<[1], [0], [0], [1], [0, 0, 1, 1], [], []>} : vector<72x4xbf16>, vector<4x128xbf16>, vector<72x128xf32> -> vector<72x128xf32>
    %28 = arith.addf %22, %27 : vector<72x128xf32>
    %c0_34 = arith.constant 0 : index
    %c0_35 = arith.constant 0 : index
    %c1_36 = arith.constant 1 : index
    %c0_37 = arith.constant 0 : index
    %29 = vector.load %arg4[%c0_34, %c0_35, %c1_36, %c0_37] : memref<1x1x90x4xbf16, #tpu.memory_space<vmem>>, vector<1x1x72x4xbf16>
    %30 = vector.shape_cast %29 : vector<1x1x72x4xbf16> to vector<72x4xbf16>
    %c5 = arith.constant 5 : index
    %c0_38 = arith.constant 0 : index
    %c0_39 = arith.constant 0 : index
    %31 = vector.load %arg6[%c5, %c0_38, %c0_39] : memref<9x4x128xbf16, #tpu.memory_space<vmem>>, vector<1x4x128xbf16>
    %32 = vector.shape_cast %31 : vector<1x4x128xbf16> to vector<4x128xbf16>
    %cst_40 = arith.constant dense<0.000000e+00> : vector<72x128xf32>
    %33 = tpu.matmul %30, %32, %cst_40 {dimension_numbers = #tpu.dot_dimension_numbers<[1], [0], [0], [1], [0, 0, 1, 1], [], []>} : vector<72x4xbf16>, vector<4x128xbf16>, vector<72x128xf32> -> vector<72x128xf32>
    %34 = arith.addf %28, %33 : vector<72x128xf32>
    %c0_41 = arith.constant 0 : index
    %c0_42 = arith.constant 0 : index
    %c9 = arith.constant 9 : index
    %c0_43 = arith.constant 0 : index
    %35 = vector.load %arg2[%c0_41, %c0_42, %c9, %c0_43] : memref<1x1x90x4xbf16, #tpu.memory_space<vmem>>, vector<1x1x72x4xbf16>
    %36 = vector.shape_cast %35 : vector<1x1x72x4xbf16> to vector<72x4xbf16>
    %c6 = arith.constant 6 : index
    %c0_44 = arith.constant 0 : index
    %c0_45 = arith.constant 0 : index
    %37 = vector.load %arg6[%c6, %c0_44, %c0_45] : memref<9x4x128xbf16, #tpu.memory_space<vmem>>, vector<1x4x128xbf16>
    %38 = vector.shape_cast %37 : vector<1x4x128xbf16> to vector<4x128xbf16>
    %cst_46 = arith.constant dense<0.000000e+00> : vector<72x128xf32>
    %39 = tpu.matmul %36, %38, %cst_46 {dimension_numbers = #tpu.dot_dimension_numbers<[1], [0], [0], [1], [0, 0, 1, 1], [], []>} : vector<72x4xbf16>, vector<4x128xbf16>, vector<72x128xf32> -> vector<72x128xf32>
    %40 = arith.addf %34, %39 : vector<72x128xf32>
    %c0_47 = arith.constant 0 : index
    %c0_48 = arith.constant 0 : index
    %c9_49 = arith.constant 9 : index
    %c0_50 = arith.constant 0 : index
    %41 = vector.load %arg3[%c0_47, %c0_48, %c9_49, %c0_50] : memref<1x1x90x4xbf16, #tpu.memory_space<vmem>>, vector<1x1x72x4xbf16>
    %42 = vector.shape_cast %41 : vector<1x1x72x4xbf16> to vector<72x4xbf16>
    %c7 = arith.constant 7 : index
    %c0_51 = arith.constant 0 : index
    %c0_52 = arith.constant 0 : index
    %43 = vector.load %arg6[%c7, %c0_51, %c0_52] : memref<9x4x128xbf16, #tpu.memory_space<vmem>>, vector<1x4x128xbf16>
    %44 = vector.shape_cast %43 : vector<1x4x128xbf16> to vector<4x128xbf16>
    %cst_53 = arith.constant dense<0.000000e+00> : vector<72x128xf32>
    %45 = tpu.matmul %42, %44, %cst_53 {dimension_numbers = #tpu.dot_dimension_numbers<[1], [0], [0], [1], [0, 0, 1, 1], [], []>} : vector<72x4xbf16>, vector<4x128xbf16>, vector<72x128xf32> -> vector<72x128xf32>
    %46 = arith.addf %40, %45 : vector<72x128xf32>
    %c0_54 = arith.constant 0 : index
    %c0_55 = arith.constant 0 : index
    %c10 = arith.constant 10 : index
    %c0_56 = arith.constant 0 : index
    %47 = vector.load %arg2[%c0_54, %c0_55, %c10, %c0_56] : memref<1x1x90x4xbf16, #tpu.memory_space<vmem>>, vector<1x1x72x4xbf16>
    %48 = vector.shape_cast %47 : vector<1x1x72x4xbf16> to vector<72x4xbf16>
    %c8 = arith.constant 8 : index
    %c0_57 = arith.constant 0 : index
    %c0_58 = arith.constant 0 : index
    %49 = vector.load %arg6[%c8, %c0_57, %c0_58] : memref<9x4x128xbf16, #tpu.memory_space<vmem>>, vector<1x4x128xbf16>
    %50 = vector.shape_cast %49 : vector<1x4x128xbf16> to vector<4x128xbf16>
    %cst_59 = arith.constant dense<0.000000e+00> : vector<72x128xf32>
    %51 = tpu.matmul %48, %50, %cst_59 {dimension_numbers = #tpu.dot_dimension_numbers<[1], [0], [0], [1], [0, 0, 1, 1], [], []>} : vector<72x4xbf16>, vector<4x128xbf16>, vector<72x128xf32> -> vector<72x128xf32>
    %52 = arith.addf %46, %51 : vector<72x128xf32>
    %c0_60 = arith.constant 0 : index
    %c0_61 = arith.constant 0 : index
    %53 = vector.load %arg7[%c0_60, %c0_61] : memref<1x128xf32, #tpu.memory_space<vmem>>, vector<1x128xf32>
    %54 = vector.broadcast %53 : vector<1x128xf32> to vector<72x128xf32>
    %55 = arith.mulf %52, %54 : vector<72x128xf32>
    %c0_62 = arith.constant 0 : index
    %c0_63 = arith.constant 0 : index
    %56 = vector.load %arg8[%c0_62, %c0_63] : memref<1x128xf32, #tpu.memory_space<vmem>>, vector<1x128xf32>
    %57 = vector.broadcast %56 : vector<1x128xf32> to vector<72x128xf32>
    %58 = arith.addf %55, %57 : vector<72x128xf32>
    %cst_64 = arith.constant 0.000000e+00 : f32
    %59 = vector.broadcast %cst_64 : f32 to vector<72x128xf32>
    %60 = arith.cmpf oge, %58, %59 : vector<72x128xf32>
    %cst_65 = arith.constant 1.000000e-01 : f32
    %61 = vector.broadcast %cst_65 : f32 to vector<72x128xf32>
    %62 = arith.mulf %61, %58 : vector<72x128xf32>
    %63 = arith.select %60, %58, %62 : vector<72x128xi1>, vector<72x128xf32>
    %c0_66 = arith.constant 0 : index
    %c0_67 = arith.constant 0 : index
    %c0_68 = arith.constant 0 : index
    %64 = vector.load %arg9[%c0_66, %c0_67, %c0_68] : memref<1x72x128xf32, #tpu.memory_space<vmem>>, vector<1x72x128xf32>
    %65 = vector.shape_cast %64 : vector<1x72x128xf32> to vector<72x128xf32>
    %66 = vector.shape_cast %63 : vector<72x128xf32> to vector<1x72x128xf32>
    tpu.vector_store %arg9[%c0_66, %c0_67, %c0_68], %66 {strides = array<i32>} : memref<1x72x128xf32, #tpu.memory_space<vmem>>, vector<1x72x128xf32>,
    return
  }
  func.func @transform_0(%arg0: i32, %arg1: i32) -> (i32, i32, i32, i32) {
    %c0_i32 = arith.constant 0 : i32
    %c0_i32_0 = arith.constant 0 : i32
    %c0_i32_1 = arith.constant 0 : i32
    return %arg0, %arg1, %c0_i32, %c0_i32_0 : i32, i32, i32, i32
  }
  func.func @transform_1(%arg0: i32, %arg1: i32) -> (i32, i32, i32, i32) {
    %c0_i32 = arith.constant 0 : i32
    %c0_i32_0 = arith.constant 0 : i32
    %c0_i32_1 = arith.constant 0 : i32
    return %arg0, %arg1, %c0_i32, %c0_i32_0 : i32, i32, i32, i32
  }
  func.func @transform_2(%arg0: i32, %arg1: i32) -> (i32, i32, i32, i32) {
    %c0_i32 = arith.constant 0 : i32
    %c0_i32_0 = arith.constant 0 : i32
    %c0_i32_1 = arith.constant 0 : i32
    return %arg0, %arg1, %c0_i32, %c0_i32_0 : i32, i32, i32, i32
  }
  func.func @transform_3(%arg0: i32, %arg1: i32) -> (i32, i32, i32, i32) {
    %c0_i32 = arith.constant 0 : i32
    %c0_i32_0 = arith.constant 0 : i32
    %c0_i32_1 = arith.constant 0 : i32
    return %arg0, %arg1, %c0_i32, %c0_i32_0 : i32, i32, i32, i32
  }
  func.func @transform_4(%arg0: i32, %arg1: i32) -> (i32, i32, i32) {
    %c0_i32 = arith.constant 0 : i32
    %c0_i32_0 = arith.constant 0 : i32
    %c0_i32_1 = arith.constant 0 : i32
    %c0_i32_2 = arith.constant 0 : i32
    return %c0_i32, %c0_i32_0, %c0_i32_1 : i32, i32, i32
  }
  func.func @transform_5(%arg0: i32, %arg1: i32) -> (i32, i32) {
    %c0_i32 = arith.constant 0 : i32
    %c0_i32_0 = arith.constant 0 : i32
    %c0_i32_1 = arith.constant 0 : i32
    return %c0_i32, %c0_i32_0 : i32, i32
  }
  func.func @transform_6(%arg0: i32, %arg1: i32) -> (i32, i32) {
    %c0_i32 = arith.constant 0 : i32
    %c0_i32_0 = arith.constant 0 : i32
    %c0_i32_1 = arith.constant 0 : i32
    return %c0_i32, %c0_i32_0 : i32, i32
  }
  func.func @transform_7(%arg0: i32, %arg1: i32) -> (i32, i32, i32) {
    %c1_i32 = arith.constant 1 : i32
    %0 = arith.muli %arg0, %c1_i32 : i32
    %1 = arith.addi %0, %arg1 : i32
    %c0_i32 = arith.constant 0 : i32
    %c0_i32_0 = arith.constant 0 : i32
    %c0_i32_1 = arith.constant 0 : i32
    return %1, %c0_i32, %c0_i32_0 : i32, i32, i32
  }
}

</mosaic_0001>

<llo_original>
// kernel: downsample_forward.1
$region0: #{downsample_forward.1}
  #allocation0 [shape = 'u32[]', space=smem, size = 0x4, offset = 0x4, fixed_abs, tag = 'smem constant byte address 0x4 - core index']
  #allocation1 [shape = 'u32[144,128]{1,0:T(1,128)}', space=vmem, size = 0x12000, scoped, tag = 'internal scratch']
  %s0 = inlined_call_operand.vmem [shape: bf16[2,1,90,4], index: 0, kind: input, shape index: {}]
  %s1 = inlined_call_operand.vmem [shape: bf16[2,1,90,4], index: 1, kind: input, shape index: {}]
  %s2 = inlined_call_operand.vmem [shape: bf16[2,1,90,4], index: 2, kind: input, shape index: {}]
  %s3 = inlined_call_operand.vmem [shape: bf16[2,1,90,4], index: 3, kind: input, shape index: {}]
  %s4 = inlined_call_operand.vmem [shape: bf16[9,4,128], index: 4, kind: input, shape index: {}]
  %s5 = inlined_call_operand.vmem [shape: f32[1,128], index: 5, kind: input, shape index: {}]
  %s6 = inlined_call_operand.vmem [shape: f32[1,128], index: 6, kind: input, shape index: {}]
  %s7 = inlined_call_operand.vmem [shape: f32[2,72,128], index: 7, kind: output, shape index: {}]
  %s8 = sld [smem:[#allocation0]]
  $region61: #{downsample_forward.1} parent=0
    _
  %s10 = ssub.s32 1, %s8
  %s11 = scalar_select 0, %s10, %s8
  loop: start=0, step=1, limit=4
  $region2: #{downsample_forward.1} parent=0 // loop_pre_header
    _
  $region3: #{downsample_forward.1} parent=0 // loop_header
    %s13 = sphi 0, %s17
    %p14 = scmp.ge.s32.totalorder %s13, 4
    %s20 = sphi 0, %s32
    %s21 = sphi 0, %s28
    %s22 = sphi 0, %s20
    %s23 = sphi 0, %s21
    %s24 = sphi 0, %s22
    %s25 = sphi 0, %s23
    %s37 = sphi 0, %s39
    %s40 = sphi 0, %s37
    %s41 = sphi 0, %s40
    %s57 = sphi 0, %s41
    %s65 = sphi 0, %s67
    %s68 = sphi 0, %s65
    %s69 = sphi 0, %s68
    %s85 = sphi 0, %s69
    %s93 = sphi 0, %s95
    %s96 = sphi 0, %s93
    %s97 = sphi 0, %s96
    %s113 = sphi 0, %s97
    %s121 = sphi 0, %s123
    %s124 = sphi 0, %s121
    %s125 = sphi 0, %s124
    %s141 = sphi 0, %s125
    %s145 = sphi 0, %s145
    %s147 = sphi 0, %s145
    %s148 = sphi 0, %s147
    %s162 = sphi 0, %s148
    %s166 = sphi 0, %s166
    %s168 = sphi 0, %s166
    %s169 = sphi 0, %s168
    %s183 = sphi 0, %s169
    %s187 = sphi 0, %s187
    %s189 = sphi 0, %s187
    %s190 = sphi 0, %s189
    %s204 = sphi 0, %s190
    %s212 = sphi 0, %s214
    %s215 = sphi 0, %s212
    %s216 = sphi 0, %s215
    %s232 = sphi 0, %s216
  $region4: #{downsample_forward.1} parent=0 // loop_header_branch
    %16 = sbr.rel (%p14) target = $region8
  $region5: #{downsample_forward.1} parent=0 // loop_body
    %s18 = ssub.s32 %s13, 1
    %s19 = ssub.s32 %s13, 2
    %s26 = sadd.s32 1, %s21
    %p27 = scmp.ge.s32.totalorder %s26, 1
    %s28 = scalar_select %p27, 0, %s26
    %s29 = sadd.s32 1, %s20
    %s30 = scalar_select %p27, %s29, %s20
    %p31 = scmp.ge.s32.totalorder %s30, 2
    %s32 = scalar_select %p31, 0, %s30
    %s33 = ssub.s32 %s20, %s32
    %s34 = ssub.s32 %s21, %s28
    %s35 = sor.u32 %s33, %s34
    %p36 = scmp.eq.s32.totalorder %s35, 0
    %s38 = sadd.s32 %s37, 1
    %s39 = scalar_select %p36, %s37, %s38
    %p42 = pneg %p36
    %p43 = scmp.eq.s32.totalorder %s13, 1
    %p44 = por %p42, %p43
    %p45 = scmp.ne.s32.totalorder %s37, %s40
    %p46 = scmp.eq.s32.totalorder %s13, 0
    %p47 = por %p45, %p46
    %p48 = scmp.ne.s32.totalorder %s37, %s40
    %p49 = scmp.eq.s32.totalorder %s18, 1
    %p50 = por %p48, %p49
    %p51 = scmp.ne.s32.totalorder %s40, %s41
    %p52 = scmp.eq.s32.totalorder %s18, 0
    %p53 = por %p51, %p52
    %p54 = scmp.ne.s32.totalorder %s40, %s41
    %p55 = scmp.eq.s32.totalorder %s19, 1
    %p56 = por %p54, %p55
    %p58 = scmp.ne.s32.totalorder %s41, %s57
    %p59 = scmp.eq.s32.totalorder %s19, 0
    %p60 = por %p58, %p59
    %s61 = ssub.s32 %s20, %s32
    %s62 = ssub.s32 %s21, %s28
    %s63 = sor.u32 %s61, %s62
    %p64 = scmp.eq.s32.totalorder %s63, 0
    %s66 = sadd.s32 %s65, 1
    %s67 = scalar_select %p64, %s65, %s66
    %p70 = pneg %p64
    %p71 = scmp.eq.s32.totalorder %s13, 1
    %p72 = por %p70, %p71
    %p73 = scmp.ne.s32.totalorder %s65, %s68
    %p74 = scmp.eq.s32.totalorder %s13, 0
    %p75 = por %p73, %p74
    %p76 = scmp.ne.s32.totalorder %s65, %s68
    %p77 = scmp.eq.s32.totalorder %s18, 1
    %p78 = por %p76, %p77
    %p79 = scmp.ne.s32.totalorder %s68, %s69
    %p80 = scmp.eq.s32.totalorder %s18, 0
    %p81 = por %p79, %p80
    %p82 = scmp.ne.s32.totalorder %s68, %s69
    %p83 = scmp.eq.s32.totalorder %s19, 1
    %p84 = por %p82, %p83
    %p86 = scmp.ne.s32.totalorder %s69, %s85
    %p87 = scmp.eq.s32.totalorder %s19, 0
    %p88 = por %p86, %p87
    %s89 = ssub.s32 %s20, %s32
    %s90 = ssub.s32 %s21, %s28
    %s91 = sor.u32 %s89, %s90
    %p92 = scmp.eq.s32.totalorder %s91, 0
    %s94 = sadd.s32 %s93, 1
    %s95 = scalar_select %p92, %s93, %s94
    %p98 = pneg %p92
    %p99 = scmp.eq.s32.totalorder %s13, 1
    %p100 = por %p98, %p99
    %p101 = scmp.ne.s32.totalorder %s93, %s96
    %p102 = scmp.eq.s32.totalorder %s13, 0
    %p103 = por %p101, %p102
    %p104 = scmp.ne.s32.totalorder %s93, %s96
    %p105 = scmp.eq.s32.totalorder %s18, 1
    %p106 = por %p104, %p105
    %p107 = scmp.ne.s32.totalorder %s96, %s97
    %p108 = scmp.eq.s32.totalorder %s18, 0
    %p109 = por %p107, %p108
    %p110 = scmp.ne.s32.totalorder %s96, %s97
    %p111 = scmp.eq.s32.totalorder %s19, 1
    %p112 = por %p110, %p111
    %p114 = scmp.ne.s32.totalorder %s97, %s113
    %p115 = scmp.eq.s32.totalorder %s19, 0
    %p116 = por %p114, %p115
    %s117 = ssub.s32 %s20, %s32
    %s118 = ssub.s32 %s21, %s28
    %s119 = sor.u32 %s117, %s118
    %p120 = scmp.eq.s32.totalorder %s119, 0
    %s122 = sadd.s32 %s121, 1
    %s123 = scalar_select %p120, %s121, %s122
    %p126 = pneg %p120
    %p127 = scmp.eq.s32.totalorder %s13, 1
    %p128 = por %p126, %p127
    %p129 = scmp.ne.s32.totalorder %s121, %s124
    %p130 = scmp.eq.s32.totalorder %s13, 0
    %p131 = por %p129, %p130
    %p132 = scmp.ne.s32.totalorder %s121, %s124
    %p133 = scmp.eq.s32.totalorder %s18, 1
    %p134 = por %p132, %p133
    %p135 = scmp.ne.s32.totalorder %s124, %s125
    %p136 = scmp.eq.s32.totalorder %s18, 0
    %p137 = por %p135, %p136
    %p138 = scmp.ne.s32.totalorder %s124, %s125
    %p139 = scmp.eq.s32.totalorder %s19, 1
    %p140 = por %p138, %p139
    %p142 = scmp.ne.s32.totalorder %s125, %s141
    %p143 = scmp.eq.s32.totalorder %s19, 0
    %p144 = por %p142, %p143
    %s146 = sadd.s32 %s145, 1
    %p149 = scmp.eq.s32.totalorder %s13, 1
    %p150 = scmp.ne.s32.totalorder %s145, %s147
    %p151 = scmp.eq.s32.totalorder %s13, 0
    %p152 = por %p150, %p151
    %p153 = scmp.ne.s32.totalorder %s145, %s147
    %p154 = scmp.eq.s32.totalorder %s18, 1
    %p155 = por %p153, %p154
    %p156 = scmp.ne.s32.totalorder %s147, %s148
    %p157 = scmp.eq.s32.totalorder %s18, 0
    %p158 = por %p156, %p157
    %p159 = scmp.ne.s32.totalorder %s147, %s148
    %p160 = scmp.eq.s32.totalorder %s19, 1
    %p161 = por %p159, %p160
    %p163 = scmp.ne.s32.totalorder %s148, %s162
    %p164 = scmp.eq.s32.totalorder %s19, 0
    %p165 = por %p163, %p164
    %s167 = sadd.s32 %s166, 1
    %p170 = scmp.eq.s32.totalorder %s13, 1
    %p171 = scmp.ne.s32.totalorder %s166, %s168
    %p172 = scmp.eq.s32.totalorder %s13, 0
    %p173 = por %p171, %p172
    %p174 = scmp.ne.s32.totalorder %s166, %s168
    %p175 = scmp.eq.s32.totalorder %s18, 1
    %p176 = por %p174, %p175
    %p177 = scmp.ne.s32.totalorder %s168, %s169
    %p178 = scmp.eq.s32.totalorder %s18, 0
    %p179 = por %p177, %p178
    %p180 = scmp.ne.s32.totalorder %s168, %s169
    %p181 = scmp.eq.s32.totalorder %s19, 1
    %p182 = por %p180, %p181
    %p184 = scmp.ne.s32.totalorder %s169, %s183
    %p185 = scmp.eq.s32.totalorder %s19, 0
    %p186 = por %p184, %p185
    %s188 = sadd.s32 %s187, 1
    %p191 = scmp.eq.s32.totalorder %s13, 1
    %p192 = scmp.ne.s32.totalorder %s187, %s189
    %p193 = scmp.eq.s32.totalorder %s13, 0
    %p194 = por %p192, %p193
    %p195 = scmp.ne.s32.totalorder %s187, %s189
    %p196 = scmp.eq.s32.totalorder %s18, 1
    %p197 = por %p195, %p196
    %p198 = scmp.ne.s32.totalorder %s189, %s190
    %p199 = scmp.eq.s32.totalorder %s18, 0
    %p200 = por %p198, %p199
    %p201 = scmp.ne.s32.totalorder %s189, %s190
    %p202 = scmp.eq.s32.totalorder %s19, 1
    %p203 = por %p201, %p202
    %p205 = scmp.ne.s32.totalorder %s190, %s204
    %p206 = scmp.eq.s32.totalorder %s19, 0
    %p207 = por %p205, %p206
    %s208 = sadd.s32 %s20, %s21
    %s209 = sadd.s32 %s32, %s28
    %s210 = ssub.s32 %s208, %s209
    %p211 = scmp.eq.s32.totalorder %s210, 0
    %s213 = sadd.s32 %s212, 1
    %s214 = scalar_select %p211, %s212, %s213
    %p217 = pneg %p211
    %p218 = scmp.eq.s32.totalorder %s13, 1
    %p219 = por %p217, %p218
    %p220 = scmp.ne.s32.totalorder %s212, %s215
    %p221 = scmp.eq.s32.totalorder %s13, 0
    %p222 = por %p220, %p221
    %p223 = scmp.ne.s32.totalorder %s212, %s215
    %p224 = scmp.eq.s32.totalorder %s18, 1
    %p225 = por %p223, %p224
    %p226 = scmp.ne.s32.totalorder %s215, %s216
    %p227 = scmp.eq.s32.totalorder %s18, 0
    %p228 = por %p226, %p227
    %p229 = scmp.ne.s32.totalorder %s215, %s216
    %p230 = scmp.eq.s32.totalorder %s19, 1
    %p231 = por %p229, %p230
    %p233 = scmp.ne.s32.totalorder %s216, %s232
    %p234 = scmp.eq.s32.totalorder %s19, 0
    %p235 = por %p233, %p234
    %p236 = scmp.le.s32.totalorder 1, %s13
    %p237 = scmp.lt.s32.totalorder %s13, 3
    %p238 = pnand %p236, %p237
    %p239 = pneg %p238
    // Predicated region
    $region9: #{downsample_forward.1} parent=5 // pred_check
      _
    $region10: #{downsample_forward.1} parent=5 // pred_check_branch
      %241 = sbr.rel (%p238) target = $region12
    $region11: #{downsample_forward.1} parent=5 // pred_region
      %s242 = ssub.s32 %s13, 1
      // Predicated region
      $region13: #{downsample_forward.1} parent=11 // pred_check
        %p243 = pneg %p158
      $region14: #{downsample_forward.1} parent=11 // pred_check_branch
        %245 = sbr.rel (%p243) target = $region16
      $region15: #{downsample_forward.1} parent=11 // pred_region
        _
      $region16: #{downsample_forward.1} parent=11 // pred_fallthru
        _
      // Predicated region
      $region17: #{downsample_forward.1} parent=11 // pred_check
        %p246 = pneg %p179
      $region18: #{downsample_forward.1} parent=11 // pred_check_branch
        %248 = sbr.rel (%p246) target = $region20
      $region19: #{downsample_forward.1} parent=11 // pred_region
        _
      $region20: #{downsample_forward.1} parent=11 // pred_fallthru
        _
      // Predicated region
      $region21: #{downsample_forward.1} parent=11 // pred_check
        %p249 = pneg %p200
      $region22: #{downsample_forward.1} parent=11 // pred_check_branch
        %251 = sbr.rel (%p249) target = $region24
      $region23: #{downsample_forward.1} parent=11 // pred_region
        _
      $region24: #{downsample_forward.1} parent=11 // pred_fallthru
        _
    $region12: #{downsample_forward.1} parent=5 // pred_fallthru
      _
    %p252 = scmp.lt.s32.totalorder %s13, 2
    // Predicated region
    $region25: #{downsample_forward.1} parent=5 // pred_check
      %p253 = pneg %p252
    $region26: #{downsample_forward.1} parent=5 // pred_check_branch
      %255 = sbr.rel (%p253) target = $region28
    $region27: #{downsample_forward.1} parent=5 // pred_region
      // Predicated region
      $region29: #{downsample_forward.1} parent=27 // pred_check
        %p256 = pneg %p47
      $region30: #{downsample_forward.1} parent=27 // pred_check_branch
        %258 = sbr.rel (%p256) target = $region32
      $region31: #{downsample_forward.1} parent=27 // pred_region
        %p259 = scmp.lt.s32.totalorder %s20, 1
        %s260 = scalar_select %p259, %s20, 1
        %p261 = scmp.lt.s32.totalorder %s21, 0
        %s262 = scalar_select %p261, %s21, 0
        %s263 = smul.addr %s262, 12
        %s264 = smul.addr %s260, 12
        %s265 = sadd.s32 %s263, %s264
        %s266 = smul.addr %s265, 4
        %s267 = scalar_lea.vmem %s0, %s266
      $region32: #{downsample_forward.1} parent=27 // pred_fallthru
        _
      // Predicated region
      $region33: #{downsample_forward.1} parent=27 // pred_check
        %p268 = pneg %p75
      $region34: #{downsample_forward.1} parent=27 // pred_check_branch
        %270 = sbr.rel (%p268) target = $region36
      $region35: #{downsample_forward.1} parent=27 // pred_region
        %p271 = scmp.lt.s32.totalorder %s20, 1
        %s272 = scalar_select %p271, %s20, 1
        %p273 = scmp.lt.s32.totalorder %s21, 0
        %s274 = scalar_select %p273, %s21, 0
        %s275 = smul.addr %s274, 12
        %s276 = smul.addr %s272, 12
        %s277 = sadd.s32 %s275, %s276
        %s278 = smul.addr %s277, 4
        %s279 = scalar_lea.vmem %s1, %s278
      $region36: #{downsample_forward.1} parent=27 // pred_fallthru
        _
      // Predicated region
      $region37: #{downsample_forward.1} parent=27 // pred_check
        %p280 = pneg %p103
      $region38: #{downsample_forward.1} parent=27 // pred_check_branch
        %282 = sbr.rel (%p280) target = $region40
      $region39: #{downsample_forward.1} parent=27 // pred_region
        %p283 = scmp.lt.s32.totalorder %s20, 1
        %s284 = scalar_select %p283, %s20, 1
        %p285 = scmp.lt.s32.totalorder %s21, 0
        %s286 = scalar_select %p285, %s21, 0
        %s287 = smul.addr %s286, 12
        %s288 = smul.addr %s284, 12
        %s289 = sadd.s32 %s287, %s288
        %s290 = smul.addr %s289, 4
        %s291 = scalar_lea.vmem %s2, %s290
      $region40: #{downsample_forward.1} parent=27 // pred_fallthru
        _
      // Predicated region
      $region41: #{downsample_forward.1} parent=27 // pred_check
        %p292 = pneg %p131
      $region42: #{downsample_forward.1} parent=27 // pred_check_branch
        %294 = sbr.rel (%p292) target = $region44
      $region43: #{downsample_forward.1} parent=27 // pred_region
        %p295 = scmp.lt.s32.totalorder %s20, 1
        %s296 = scalar_select %p295, %s20, 1
        %p297 = scmp.lt.s32.totalorder %s21, 0
        %s298 = scalar_select %p297, %s21, 0
        %s299 = smul.addr %s298, 12
        %s300 = smul.addr %s296, 12
        %s301 = sadd.s32 %s299, %s300
        %s302 = smul.addr %s301, 4
        %s303 = scalar_lea.vmem %s3, %s302
      $region44: #{downsample_forward.1} parent=27 // pred_fallthru
        _
    $region28: #{downsample_forward.1} parent=5 // pred_fallthru
      _
    %p304 = scmp.le.s32.totalorder 1, %s13
    %p305 = scmp.lt.s32.totalorder %s13, 3
    %p306 = pnand %p304, %p305
    %p307 = pneg %p306
    // Predicated region
    $region45: #{downsample_forward.1} parent=5 // pred_check
      _
    $region46: #{downsample_forward.1} parent=5 // pred_check_branch
      %309 = sbr.rel (%p306) target = $region48
    $region47: #{downsample_forward.1} parent=5 // pred_region
      %s310 = ssub.s32 %s13, 1
      %p311 = scmp.lt.s32.totalorder %s22, 1
      %s312 = scalar_select %p311, %s22, 1
      %p313 = scmp.lt.s32.totalorder %s23, 0
      %s314 = scalar_select %p313, %s23, 0
      %s315 = smul.addr %s314, 12
      %s316 = smul.addr %s312, 12
      %s317 = sadd.s32 %s315, %s316
      %s318 = smul.addr %s317, 4
      %s319 = scalar_lea.vmem %s0, %s318
      %p320 = pneg %p53
      %p321 = pneg %p50
      %p322 = scmp.lt.s32.totalorder %s22, 1
      %s323 = scalar_select %p322, %s22, 1
      %p324 = scmp.lt.s32.totalorder %s23, 0
      %s325 = scalar_select %p324, %s23, 0
      %s326 = smul.addr %s325, 12
      %s327 = smul.addr %s323, 12
      %s328 = sadd.s32 %s326, %s327
      %s329 = smul.addr %s328, 4
      %s330 = scalar_lea.vmem %s1, %s329
      %p331 = pneg %p81
      %p332 = pneg %p78
      %p333 = scmp.lt.s32.totalorder %s22, 1
      %s334 = scalar_select %p333, %s22, 1
      %p335 = scmp.lt.s32.totalorder %s23, 0
      %s336 = scalar_select %p335, %s23, 0
      %s337 = smul.addr %s336, 12
      %s338 = smul.addr %s334, 12
      %s339 = sadd.s32 %s337, %s338
      %s340 = smul.addr %s339, 4
      %s341 = scalar_lea.vmem %s2, %s340
      %p342 = pneg %p109
      %p343 = pneg %p106
      %p344 = scmp.lt.s32.totalorder %s22, 1
      %s345 = scalar_select %p344, %s22, 1
      %p346 = scmp.lt.s32.totalorder %s23, 0
      %s347 = scalar_select %p346, %s23, 0
      %s348 = smul.addr %s347, 12
      %s349 = smul.addr %s345, 12
      %s350 = sadd.s32 %s348, %s349
      %s351 = smul.addr %s350, 4
      %s352 = scalar_lea.vmem %s3, %s351
      %p353 = pneg %p137
      %p354 = pneg %p134
      %p355 = pneg %p158
      %p356 = pneg %p155
      %p357 = pneg %p179
      %p358 = pneg %p176
      %p359 = pneg %p200
      %p360 = pneg %p197
      %p361 = pneg %p228
      %p362 = pneg %p225
      %s363 = sadd.s32 %s22, %s23
      %p364 = scmp.lt.s32.totalorder %s363, 1
      %s365 = scalar_select %p364, %s363, 1
      %s366 = smul.addr %s365, 9
      %s367 = smul.addr %s366, 8
      %s368 = scalar_lea.vmem %s7, %s367
      %p369 = scmp.lt.s32.totalorder %s22, 1
      %s370 = scalar_select %p369, %s22, 1
      %p371 = scmp.lt.s32.totalorder %s23, 0
      %s372 = scalar_select %p371, %s23, 0
      %s373 = smul.addr %s372, 12
      %s374 = smul.addr %s370, 12
      %s375 = sadd.s32 %s373, %s374
      %s376 = smul.addr %s375, 4
      %s377 = scalar_lea.vmem %s0, %s376
      %p378 = scmp.lt.s32.totalorder %s22, 1
      %s379 = scalar_select %p378, %s22, 1
      %p380 = scmp.lt.s32.totalorder %s23, 0
      %s381 = scalar_select %p380, %s23, 0
      %s382 = smul.addr %s381, 12
      %s383 = smul.addr %s379, 12
      %s384 = sadd.s32 %s382, %s383
      %s385 = smul.addr %s384, 4
      %s386 = scalar_lea.vmem %s1, %s385
      %p387 = scmp.lt.s32.totalorder %s22, 1
      %s388 = scalar_select %p387, %s22, 1
      %p389 = scmp.lt.s32.totalorder %s23, 0
      %s390 = scalar_select %p389, %s23, 0
      %s391 = smul.addr %s390, 12
      %s392 = smul.addr %s388, 12
      %s393 = sadd.s32 %s391, %s392
      %s394 = smul.addr %s393, 4
      %s395 = scalar_lea.vmem %s2, %s394
      %p396 = scmp.lt.s32.totalorder %s22, 1
      %s397 = scalar_select %p396, %s22, 1
      %p398 = scmp.lt.s32.totalorder %s23, 0
      %s399 = scalar_select %p398, %s23, 0
      %s400 = smul.addr %s399, 12
      %s401 = smul.addr %s397, 12
      %s402 = sadd.s32 %s400, %s401
      %s403 = smul.addr %s402, 4
      %s404 = scalar_lea.vmem %s3, %s403
      %s405 = sadd.s32 %s22, %s23
      %p406 = scmp.lt.s32.totalorder %s405, 1
      %s407 = scalar_select %p406, %s405, 1
      %s408 = smul.addr %s407, 9
      %s409 = smul.addr %s408, 8
      %s410 = scalar_lea.vmem %s7, %s409
      %s411 = sadd.s32 %s22, %s23
      %v413 = vld [vmem:[%s377] sm:$0xf]
      %v414 = vld [vmem:[%s377 + $0x4] sm:$0xf]
      %v415 = vld [vmem:[%s377 + $0x8] sm:$0xf]
      %v416 = vld [vmem:[%s377 + $0xc] sm:$0xf]
      %v417 = vld [vmem:[%s377 + $0x10] sm:$0xf]
      %v418 = vld [vmem:[%s377 + $0x14] sm:$0xf]
      %v419 = vld [vmem:[%s377 + $0x18] sm:$0xf]
      %v420 = vld [vmem:[%s377 + $0x1c] sm:$0xf]
      %v421 = vld [vmem:[%s377 + $0x20] sm:$0xf]
      %v422 = vld [vmem:[%s4] sm:$0x3]
      %v423 = vld [vmem:[%s386] sm:$0xf]
      %v424 = vld [vmem:[%s386 + $0x4] sm:$0xf]
      %v425 = vld [vmem:[%s386 + $0x8] sm:$0xf]
      %v426 = vld [vmem:[%s386 + $0xc] sm:$0xf]
      %v427 = vld [vmem:[%s386 + $0x10] sm:$0xf]
      %v428 = vld [vmem:[%s386 + $0x14] sm:$0xf]
      %v429 = vld [vmem:[%s386 + $0x18] sm:$0xf]
      %v430 = vld [vmem:[%s386 + $0x1c] sm:$0xf]
      %v431 = vld [vmem:[%s386 + $0x20] sm:$0xf]
      %s432 = scalar_lea.vmem %s4, 2
      %v433 = vld [vmem:[%s432] sm:$0x3]
      %v443 = vunpack.c.l.b16 %v423
      %v444 = vunpack.c.l.b16 %v424
      %v445 = vunpack.c.l.b16 %v425
      %v446 = vunpack.c.l.b16 %v426
      %v447 = vunpack.c.l.b16 %v427
      %v448 = vunpack.c.l.b16 %v428
      %v449 = vunpack.c.l.b16 %v429
      %v450 = vunpack.c.l.b16 %v430
      %v451 = vunpack.c.l.b16 %v431
      %v452 = vpack.c.b16 %v444, %v443
      %v453 = vpack.c.b16 %v446, %v445
      %v454 = vpack.c.b16 %v448, %v447
      %v455 = vpack.c.b16 %v450, %v449
      %v456 = vpack.c.b16 %v451, %v451
      %vm457 = vcmask 31744
      %v459 = vsel %vm457, %v452, 0
      %v462 = vsel %vm457, %v453, 0
      %v465 = vsel %vm457, %v454, 0
      %v468 = vsel %vm457, %v455, 0
      %v471 = vsel %vm457, %v456, 0
      %vm473 = vcmask 1041408
      %v475 = vsel %vm473, %v433, 0
      %477 = vmatprep.subr.bf16.mxu0 0
      %478 = vmatpush1.bf16.msra.mxu0 %v475
      %479 = vmatprep.subr.bf16.mxu0 0
      %480 = vmatpush1.bf16.msra.mxu0 0
      %481 = vmatprep.subr.bf16.mxu0 0
      %482 = vmatpush1.bf16.msra.mxu0 0
      %483 = vmatprep.subr.bf16.mxu0 0
      %484 = vmatpush1.bf16.msra.mxu0 0
      %485 = vmatprep.subr.bf16.mxu0 0
      %486 = vmatpush1.bf16.msra.mxu0 0
      %487 = vmatprep.subr.bf16.mxu0 0
      %488 = vmatpush1.bf16.msra.mxu0 0
      %489 = vmatprep.subr.bf16.mxu0 0
      %490 = vmatpush1.bf16.msra.mxu0 0
      %491 = vmatprep.subr.bf16.mxu0 0
      %492 = vmatpush1.bf16.msra.mxu0 0
      %493 = vmatprep.subr.bf16.mxu0 0
      %494 = vmatpush1.bf16.msra.mxu0 0
      %495 = vmatprep.subr.bf16.mxu0 0
      %496 = vmatpush1.bf16.msra.mxu0 0
      %497 = vmatprep.subr.bf16.mxu0 0
      %498 = vmatpush1.bf16.msra.mxu0 0
      %499 = vmatprep.subr.bf16.mxu0 0
      %500 = vmatpush1.bf16.msra.mxu0 0
      %501 = vmatprep.subr.bf16.mxu0 0
      %502 = vmatpush1.bf16.msra.mxu0 0
      %503 = vmatprep.subr.bf16.mxu0 0
      %504 = vmatpush1.bf16.msra.mxu0 0
      %505 = vmatprep.subr.bf16.mxu0 0
      %506 = vmatpush1.bf16.msra.mxu0 0
      %507 = vmatprep.subr.bf16.mxu0 0
      %508 = vmatpush1.bf16.msra.mxu0 0
      %509 = vmatprep.mubr.bf16.mxu0 0
      %510 = vmatmul.mubr.bf16.gmra.mrb[0].mxu0 %v459
      %v511 = vpop.f32.mrb[0].mxu0
      %v512 = vadd.f32 0.0, %v511
      %v513 = vpop.f32.mrb[0].mxu0
      %v514 = vpop.f32.mrb[0].mxu0
      %v515 = vadd.f32 0.0, %v514
      %v516 = vpop.f32.mrb[0].mxu0
      %517 = vmatprep.mubr.bf16.mxu0 0
      %518 = vmatmul.mubr.bf16.gmra.mrb[0].mxu0 %v462
      %v519 = vpop.f32.mrb[0].mxu0
      %v520 = vadd.f32 0.0, %v519
      %v521 = vpop.f32.mrb[0].mxu0
      %v522 = vpop.f32.mrb[0].mxu0
      %v523 = vadd.f32 0.0, %v522
      %v524 = vpop.f32.mrb[0].mxu0
      %525 = vmatprep.mubr.bf16.mxu0 0
      %526 = vmatmul.mubr.bf16.gmra.mrb[0].mxu0 %v465
      %v527 = vpop.f32.mrb[0].mxu0
      %v528 = vadd.f32 0.0, %v527
      %v529 = vpop.f32.mrb[0].mxu0
      %v530 = vpop.f32.mrb[0].mxu0
      %v531 = vadd.f32 0.0, %v530
      %v532 = vpop.f32.mrb[0].mxu0
      %533 = vmatprep.mubr.bf16.mxu0 0
      %534 = vmatmul.mubr.bf16.gmra.mrb[0].mxu0 %v468
      %v535 = vpop.f32.mrb[0].mxu0
      %v536 = vadd.f32 0.0, %v535
      %v537 = vpop.f32.mrb[0].mxu0
      %v538 = vpop.f32.mrb[0].mxu0
      %v539 = vadd.f32 0.0, %v538
      %v540 = vpop.f32.mrb[0].mxu0
      %541 = vmatprep.mubr.bf16.mxu0 0
      %542 = vmatmul.mubr.bf16.gmra.mrb[0].mxu0 %v471
      %v543 = vpop.f32.mrb[0].mxu0
      %v544 = vadd.f32 0.0, %v543
      %v545 = vpop.f32.mrb[0].mxu0
      %v546 = vpop.f32.mrb[0].mxu0
      %v547 = vpop.f32.mrb[0].mxu0
      %548 = vdwg.mxu0
      %v558 = vunpack.c.l.b16 %v413
      %v559 = vunpack.c.l.b16 %v414
      %v560 = vunpack.c.l.b16 %v415
      %v561 = vunpack.c.l.b16 %v416
      %v562 = vunpack.c.l.b16 %v417
      %v563 = vunpack.c.l.b16 %v418
      %v564 = vunpack.c.l.b16 %v419
      %v565 = vunpack.c.l.b16 %v420
      %v566 = vunpack.c.l.b16 %v421
      %v567 = vpack.c.b16 %v559, %v558
      %v568 = vpack.c.b16 %v561, %v560
      %v569 = vpack.c.b16 %v563, %v562
      %v570 = vpack.c.b16 %v565, %v564
      %v571 = vpack.c.b16 %v566, %v566
      %v573 = vsel %vm457, %v567, 0
      %v576 = vsel %vm457, %v568, 0
      %v579 = vsel %vm457, %v569, 0
      %v582 = vsel %vm457, %v570, 0
      %v585 = vsel %vm457, %v571, 0
      %v588 = vsel %vm473, %v422, 0
      %590 = vmatprep.subr.bf16.mxu0 0
      %591 = vmatpush1.bf16.msra.mxu0 %v588
      %592 = vmatprep.subr.bf16.mxu0 0
      %593 = vmatpush1.bf16.msra.mxu0 0
      %594 = vmatprep.subr.bf16.mxu0 0
      %595 = vmatpush1.bf16.msra.mxu0 0
      %596 = vmatprep.subr.bf16.mxu0 0
      %597 = vmatpush1.bf16.msra.mxu0 0
      %598 = vmatprep.subr.bf16.mxu0 0
      %599 = vmatpush1.bf16.msra.mxu0 0
      %600 = vmatprep.subr.bf16.mxu0 0
      %601 = vmatpush1.bf16.msra.mxu0 0
      %602 = vmatprep.subr.bf16.mxu0 0
      %603 = vmatpush1.bf16.msra.mxu0 0
      %604 = vmatprep.subr.bf16.mxu0 0
      %605 = vmatpush1.bf16.msra.mxu0 0
      %606 = vmatprep.subr.bf16.mxu0 0
      %607 = vmatpush1.bf16.msra.mxu0 0
      %608 = vmatprep.subr.bf16.mxu0 0
      %609 = vmatpush1.bf16.msra.mxu0 0
      %610 = vmatprep.subr.bf16.mxu0 0
      %611 = vmatpush1.bf16.msra.mxu0 0
      %612 = vmatprep.subr.bf16.mxu0 0
      %613 = vmatpush1.bf16.msra.mxu0 0
      %614 = vmatprep.subr.bf16.mxu0 0
      %615 = vmatpush1.bf16.msra.mxu0 0
      %616 = vmatprep.subr.bf16.mxu0 0
      %617 = vmatpush1.bf16.msra.mxu0 0
      %618 = vmatprep.subr.bf16.mxu0 0
      %619 = vmatpush1.bf16.msra.mxu0 0
      %620 = vmatprep.subr.bf16.mxu0 0
      %621 = vmatpush1.bf16.msra.mxu0 0
      %622 = vmatprep.mubr.bf16.mxu0 0
      %623 = vmatmul.mubr.bf16.gmra.mrb[0].mxu0 %v573
      %v624 = vpop.f32.mrb[0].mxu0
      %v625 = vadd.f32 %v512, %v624
      %v626 = vpop.f32.mrb[0].mxu0
      %v627 = vpop.f32.mrb[0].mxu0
      %v628 = vadd.f32 %v515, %v627
      %v629 = vpop.f32.mrb[0].mxu0
      %630 = vmatprep.mubr.bf16.mxu0 0
      %631 = vmatmul.mubr.bf16.gmra.mrb[0].mxu0 %v576
      %v632 = vpop.f32.mrb[0].mxu0
      %v633 = vadd.f32 %v520, %v632
      %v634 = vpop.f32.mrb[0].mxu0
      %v635 = vpop.f32.mrb[0].mxu0
      %v636 = vadd.f32 %v523, %v635
      %v637 = vpop.f32.mrb[0].mxu0
      %638 = vmatprep.mubr.bf16.mxu0 0
      %639 = vmatmul.mubr.bf16.gmra.mrb[0].mxu0 %v579
      %v640 = vpop.f32.mrb[0].mxu0
      %v641 = vadd.f32 %v528, %v640
      %v642 = vpop.f32.mrb[0].mxu0
      %v643 = vpop.f32.mrb[0].mxu0
      %v644 = vadd.f32 %v531, %v643
      %v645 = vpop.f32.mrb[0].mxu0
      %646 = vmatprep.mubr.bf16.mxu0 0
      %647 = vmatmul.mubr.bf16.gmra.mrb[0].mxu0 %v582
      %v648 = vpop.f32.mrb[0].mxu0
      %v649 = vadd.f32 %v536, %v648
      %v650 = vpop.f32.mrb[0].mxu0
      %v651 = vpop.f32.mrb[0].mxu0
      %v652 = vadd.f32 %v539, %v651
      %v653 = vpop.f32.mrb[0].mxu0
      %654 = vmatprep.mubr.bf16.mxu0 0
      %655 = vmatmul.mubr.bf16.gmra.mrb[0].mxu0 %v585
      %v656 = vpop.f32.mrb[0].mxu0
      %v657 = vadd.f32 %v544, %v656
      %v658 = vpop.f32.mrb[0].mxu0
      %v659 = vpop.f32.mrb[0].mxu0
      %v660 = vpop.f32.mrb[0].mxu0
      %661 = vdwg.mxu0
      %v662 = vld [vmem:[%s377] sm:$0xf]
      %v663 = vld [vmem:[%s377 + $0x4] sm:$0xf]
      %v664 = vld [vmem:[%s377 + $0x8] sm:$0xf]
      %v665 = vld [vmem:[%s377 + $0xc] sm:$0xf]
      %v666 = vld [vmem:[%s377 + $0x10] sm:$0xf]
      %v667 = vld [vmem:[%s377 + $0x14] sm:$0xf]
      %v668 = vld [vmem:[%s377 + $0x18] sm:$0xf]
      %v669 = vld [vmem:[%s377 + $0x1c] sm:$0xf]
      %v670 = vld [vmem:[%s377 + $0x20] sm:$0xf]
      %v671 = vld [vmem:[%s377 + $0x24] sm:$0x1]
      %s672 = scalar_lea.vmem %s4, 4
      %v673 = vld [vmem:[%s672] sm:$0x3]
      %v684 = vunpack.c.l.b16 %v662
      %v685 = vunpack.c.l.b16 %v663
      %v686 = vunpack.c.l.b16 %v664
      %v687 = vunpack.c.l.b16 %v665
      %v688 = vunpack.c.l.b16 %v666
      %v689 = vunpack.c.l.b16 %v667
      %v690 = vunpack.c.l.b16 %v668
      %v691 = vunpack.c.l.b16 %v669
      %v692 = vunpack.c.l.b16 %v670
      %v693 = vunpack.c.l.b16 %v671
      %v694 = vpack.c.b16 %v685, %v684
      %v695 = vpack.c.b16 %v687, %v686
      %v696 = vpack.c.b16 %v689, %v688
      %v697 = vpack.c.b16 %v691, %v690
      %v698 = vpack.c.b16 %v693, %v692
      %vm699 = vsmask.f32 7424
      %v701 = vshrl.u32 %v694, 16
      %v703 = vshll.u32 %v694, 16
      %v705 = vrot.slane %v703, 1
      %v706 = vor.u32 %v701, %v705
      %v708 = vshll.u32 %v695, 16
      %v710 = vrot.slane %v708, 1
      %v711 = vsel %vm699, %v706, %v710
      %v712 = vshrl.u32 %v695, 16
      %v714 = vor.u32 %v712, %v710
      %v716 = vshll.u32 %v696, 16
      %v718 = vrot.slane %v716, 1
      %v719 = vsel %vm699, %v714, %v718
      %v720 = vshrl.u32 %v696, 16
      %v722 = vor.u32 %v720, %v718
      %v724 = vshll.u32 %v697, 16
      %v726 = vrot.slane %v724, 1
      %v727 = vsel %vm699, %v722, %v726
      %v728 = vshrl.u32 %v697, 16
      %v730 = vor.u32 %v728, %v726
      %v732 = vshll.u32 %v698, 16
      %v734 = vrot.slane %v732, 1
      %v735 = vsel %vm699, %v730, %v734
      %v736 = vshrl.u32 %v698, 16
      %v738 = vor.u32 %v736, %v734
      %v740 = vsel %vm457, %v711, 0
      %v743 = vsel %vm457, %v719, 0
      %v746 = vsel %vm457, %v727, 0
      %v749 = vsel %vm457, %v735, 0
      %v752 = vsel %vm457, %v738, 0
      %v755 = vsel %vm473, %v673, 0
      %757 = vmatprep.subr.bf16.mxu0 0
      %758 = vmatpush1.bf16.msra.mxu0 %v755
      %759 = vmatprep.subr.bf16.mxu0 0
      %760 = vmatpush1.bf16.msra.mxu0 0
      %761 = vmatprep.subr.bf16.mxu0 0
      %762 = vmatpush1.bf16.msra.mxu0 0
      %763 = vmatprep.subr.bf16.mxu0 0
      %764 = vmatpush1.bf16.msra.mxu0 0
      %765 = vmatprep.subr.bf16.mxu0 0
      %766 = vmatpush1.bf16.msra.mxu0 0
      %767 = vmatprep.subr.bf16.mxu0 0
      %768 = vmatpush1.bf16.msra.mxu0 0
      %769 = vmatprep.subr.bf16.mxu0 0
      %770 = vmatpush1.bf16.msra.mxu0 0
      %771 = vmatprep.subr.bf16.mxu0 0
      %772 = vmatpush1.bf16.msra.mxu0 0
      %773 = vmatprep.subr.bf16.mxu0 0
      %774 = vmatpush1.bf16.msra.mxu0 0
      %775 = vmatprep.subr.bf16.mxu0 0
      %776 = vmatpush1.bf16.msra.mxu0 0
      %777 = vmatprep.subr.bf16.mxu0 0
      %778 = vmatpush1.bf16.msra.mxu0 0
      %779 = vmatprep.subr.bf16.mxu0 0
      %780 = vmatpush1.bf16.msra.mxu0 0
      %781 = vmatprep.subr.bf16.mxu0 0
      %782 = vmatpush1.bf16.msra.mxu0 0
      %783 = vmatprep.subr.bf16.mxu0 0
      %784 = vmatpush1.bf16.msra.mxu0 0
      %785 = vmatprep.subr.bf16.mxu0 0
      %786 = vmatpush1.bf16.msra.mxu0 0
      %787 = vmatprep.subr.bf16.mxu0 0
      %788 = vmatpush1.bf16.msra.mxu0 0
      %789 = vmatprep.mubr.bf16.mxu0 0
      %790 = vmatmul.mubr.bf16.gmra.mrb[0].mxu0 %v740
      %v791 = vpop.f32.mrb[0].mxu0
      %v792 = vadd.f32 0.0, %v791
      %v793 = vpop.f32.mrb[0].mxu0
      %v794 = vpop.f32.mrb[0].mxu0
      %v795 = vadd.f32 0.0, %v794
      %v796 = vpop.f32.mrb[0].mxu0
      %797 = vmatprep.mubr.bf16.mxu0 0
      %798 = vmatmul.mubr.bf16.gmra.mrb[0].mxu0 %v743
      %v799 = vpop.f32.mrb[0].mxu0
      %v800 = vadd.f32 0.0, %v799
      %v801 = vpop.f32.mrb[0].mxu0
      %v802 = vpop.f32.mrb[0].mxu0
      %v803 = vadd.f32 0.0, %v802
      %v804 = vpop.f32.mrb[0].mxu0
      %805 = vmatprep.mubr.bf16.mxu0 0
      %806 = vmatmul.mubr.bf16.gmra.mrb[0].mxu0 %v746
      %v807 = vpop.f32.mrb[0].mxu0
      %v808 = vadd.f32 0.0, %v807
      %v809 = vpop.f32.mrb[0].mxu0
      %v810 = vpop.f32.mrb[0].mxu0
      %v811 = vadd.f32 0.0, %v810
      %v812 = vpop.f32.mrb[0].mxu0
      %813 = vmatprep.mubr.bf16.mxu0 0
      %814 = vmatmul.mubr.bf16.gmra.mrb[0].mxu0 %v749
      %v815 = vpop.f32.mrb[0].mxu0
      %v816 = vadd.f32 0.0, %v815
      %v817 = vpop.f32.mrb[0].mxu0
      %v818 = vpop.f32.mrb[0].mxu0
      %v819 = vadd.f32 0.0, %v818
      %v820 = vpop.f32.mrb[0].mxu0
      %821 = vmatprep.mubr.bf16.mxu0 0
      %822 = vmatmul.mubr.bf16.gmra.mrb[0].mxu0 %v752
      %v823 = vpop.f32.mrb[0].mxu0
      %v824 = vadd.f32 0.0, %v823
      %v825 = vpop.f32.mrb[0].mxu0
      %v826 = vpop.f32.mrb[0].mxu0
      %v827 = vpop.f32.mrb[0].mxu0
      %828 = vdwg.mxu0
      %v829 = vadd.f32 %v625, %v792
      %v830 = vadd.f32 %v628, %v795
      %v831 = vadd.f32 %v633, %v800
      %v832 = vadd.f32 %v636, %v803
      %v833 = vadd.f32 %v641, %v808
      %v834 = vadd.f32 %v644, %v811
      %v835 = vadd.f32 %v649, %v816
      %v836 = vadd.f32 %v652, %v819
      %v837 = vadd.f32 %v657, %v824
      %v838 = vld [vmem:[%s395] sm:$0xf]
      %v839 = vld [vmem:[%s395 + $0x4] sm:$0xf]
      %v840 = vld [vmem:[%s395 + $0x8] sm:$0xf]
      %v841 = vld [vmem:[%s395 + $0xc] sm:$0xf]
      %v842 = vld [vmem:[%s395 + $0x10] sm:$0xf]
      %v843 = vld [vmem:[%s395 + $0x14] sm:$0xf]
      %v844 = vld [vmem:[%s395 + $0x18] sm:$0xf]
      %v845 = vld [vmem:[%s395 + $0x1c] sm:$0xf]
      %v846 = vld [vmem:[%s395 + $0x20] sm:$0xf]
      %s847 = scalar_lea.vmem %s4, 6
      %v848 = vld [vmem:[%s847] sm:$0x3]
      %v858 = vunpack.c.l.b16 %v838
      %v859 = vunpack.c.l.b16 %v839
      %v860 = vunpack.c.l.b16 %v840
      %v861 = vunpack.c.l.b16 %v841
      %v862 = vunpack.c.l.b16 %v842
      %v863 = vunpack.c.l.b16 %v843
      %v864 = vunpack.c.l.b16 %v844
      %v865 = vunpack.c.l.b16 %v845
      %v866 = vunpack.c.l.b16 %v846
      %v867 = vpack.c.b16 %v859, %v858
      %v868 = vpack.c.b16 %v861, %v860
      %v869 = vpack.c.b16 %v863, %v862
      %v870 = vpack.c.b16 %v865, %v864
      %v871 = vpack.c.b16 %v866, %v866
      %v873 = vsel %vm457, %v867, 0
      %v876 = vsel %vm457, %v868, 0
      %v879 = vsel %vm457, %v869, 0
      %v882 = vsel %vm457, %v870, 0
      %v885 = vsel %vm457, %v871, 0
      %v888 = vsel %vm473, %v848, 0
      %890 = vmatprep.subr.bf16.mxu0 0
      %891 = vmatpush1.bf16.msra.mxu0 %v888
      %892 = vmatprep.subr.bf16.mxu0 0
      %893 = vmatpush1.bf16.msra.mxu0 0
      %894 = vmatprep.subr.bf16.mxu0 0
      %895 = vmatpush1.bf16.msra.mxu0 0
      %896 = vmatprep.subr.bf16.mxu0 0
      %897 = vmatpush1.bf16.msra.mxu0 0
      %898 = vmatprep.subr.bf16.mxu0 0
      %899 = vmatpush1.bf16.msra.mxu0 0
      %900 = vmatprep.subr.bf16.mxu0 0
      %901 = vmatpush1.bf16.msra.mxu0 0
      %902 = vmatprep.subr.bf16.mxu0 0
      %903 = vmatpush1.bf16.msra.mxu0 0
      %904 = vmatprep.subr.bf16.mxu0 0
      %905 = vmatpush1.bf16.msra.mxu0 0
      %906 = vmatprep.subr.bf16.mxu0 0
      %907 = vmatpush1.bf16.msra.mxu0 0
      %908 = vmatprep.subr.bf16.mxu0 0
      %909 = vmatpush1.bf16.msra.mxu0 0
      %910 = vmatprep.subr.bf16.mxu0 0
      %911 = vmatpush1.bf16.msra.mxu0 0
      %912 = vmatprep.subr.bf16.mxu0 0
      %913 = vmatpush1.bf16.msra.mxu0 0
      %914 = vmatprep.subr.bf16.mxu0 0
      %915 = vmatpush1.bf16.msra.mxu0 0
      %916 = vmatprep.subr.bf16.mxu0 0
      %917 = vmatpush1.bf16.msra.mxu0 0
      %918 = vmatprep.subr.bf16.mxu0 0
      %919 = vmatpush1.bf16.msra.mxu0 0
      %920 = vmatprep.subr.bf16.mxu0 0
      %921 = vmatpush1.bf16.msra.mxu0 0
      %922 = vmatprep.mubr.bf16.mxu0 0
      %923 = vmatmul.mubr.bf16.gmra.mrb[0].mxu0 %v873
      %v924 = vpop.f32.mrb[0].mxu0
      %v925 = vadd.f32 0.0, %v924
      %v926 = vpop.f32.mrb[0].mxu0
      %v927 = vpop.f32.mrb[0].mxu0
      %v928 = vadd.f32 0.0, %v927
      %v929 = vpop.f32.mrb[0].mxu0
      %930 = vmatprep.mubr.bf16.mxu0 0
      %931 = vmatmul.mubr.bf16.gmra.mrb[0].mxu0 %v876
      %v932 = vpop.f32.mrb[0].mxu0
      %v933 = vadd.f32 0.0, %v932
      %v934 = vpop.f32.mrb[0].mxu0
      %v935 = vpop.f32.mrb[0].mxu0
      %v936 = vadd.f32 0.0, %v935
      %v937 = vpop.f32.mrb[0].mxu0
      %938 = vmatprep.mubr.bf16.mxu0 0
      %939 = vmatmul.mubr.bf16.gmra.mrb[0].mxu0 %v879
      %v940 = vpop.f32.mrb[0].mxu0
      %v941 = vadd.f32 0.0, %v940
      %v942 = vpop.f32.mrb[0].mxu0
      %v943 = vpop.f32.mrb[0].mxu0
      %v944 = vadd.f32 0.0, %v943
      %v945 = vpop.f32.mrb[0].mxu0
      %946 = vmatprep.mubr.bf16.mxu0 0
      %947 = vmatmul.mubr.bf16.gmra.mrb[0].mxu0 %v882
      %v948 = vpop.f32.mrb[0].mxu0
      %v949 = vadd.f32 0.0, %v948
      %v950 = vpop.f32.mrb[0].mxu0
      %v951 = vpop.f32.mrb[0].mxu0
      %v952 = vadd.f32 0.0, %v951
      %v953 = vpop.f32.mrb[0].mxu0
      %954 = vmatprep.mubr.bf16.mxu0 0
      %955 = vmatmul.mubr.bf16.gmra.mrb[0].mxu0 %v885
      %v956 = vpop.f32.mrb[0].mxu0
      %v957 = vadd.f32 0.0, %v956
      %v958 = vpop.f32.mrb[0].mxu0
      %v959 = vpop.f32.mrb[0].mxu0
      %v960 = vpop.f32.mrb[0].mxu0
      %961 = vdwg.mxu0
      %v962 = vadd.f32 %v829, %v925
      %v963 = vadd.f32 %v830, %v928
      %v964 = vadd.f32 %v831, %v933
      %v965 = vadd.f32 %v832, %v936
      %v966 = vadd.f32 %v833, %v941
      %v967 = vadd.f32 %v834, %v944
      %v968 = vadd.f32 %v835, %v949
      %v969 = vadd.f32 %v836, %v952
      %v970 = vadd.f32 %v837, %v957
      %v971 = vld [vmem:[%s404] sm:$0xf]
      %v972 = vld [vmem:[%s404 + $0x4] sm:$0xf]
      %v973 = vld [vmem:[%s404 + $0x8] sm:$0xf]
      %v974 = vld [vmem:[%s404 + $0xc] sm:$0xf]
      %v975 = vld [vmem:[%s404 + $0x10] sm:$0xf]
      %v976 = vld [vmem:[%s404 + $0x14] sm:$0xf]
      %v977 = vld [vmem:[%s404 + $0x18] sm:$0xf]
      %v978 = vld [vmem:[%s404 + $0x1c] sm:$0xf]
      %v979 = vld [vmem:[%s404 + $0x20] sm:$0xf]
      %s980 = scalar_lea.vmem %s4, 8
      %v981 = vld [vmem:[%s980] sm:$0x3]
      %v991 = vunpack.c.l.b16 %v971
      %v992 = vunpack.c.l.b16 %v972
      %v993 = vunpack.c.l.b16 %v973
      %v994 = vunpack.c.l.b16 %v974
      %v995 = vunpack.c.l.b16 %v975
      %v996 = vunpack.c.l.b16 %v976
      %v997 = vunpack.c.l.b16 %v977
      %v998 = vunpack.c.l.b16 %v978
      %v999 = vunpack.c.l.b16 %v979
      %v1000 = vpack.c.b16 %v992, %v991
      %v1001 = vpack.c.b16 %v994, %v993
      %v1002 = vpack.c.b16 %v996, %v995
      %v1003 = vpack.c.b16 %v998, %v997
      %v1004 = vpack.c.b16 %v999, %v999
      %v1006 = vsel %vm457, %v1000, 0
      %v1009 = vsel %vm457, %v1001, 0
      %v1012 = vsel %vm457, %v1002, 0
      %v1015 = vsel %vm457, %v1003, 0
      %v1018 = vsel %vm457, %v1004, 0
      %v1021 = vsel %vm473, %v981, 0
      %1023 = vmatprep.subr.bf16.mxu0 0
      %1024 = vmatpush1.bf16.msra.mxu0 %v1021
      %1025 = vmatprep.subr.bf16.mxu0 0
      %1026 = vmatpush1.bf16.msra.mxu0 0
      %1027 = vmatprep.subr.bf16.mxu0 0
      %1028 = vmatpush1.bf16.msra.mxu0 0
      %1029 = vmatprep.subr.bf16.mxu0 0
      %1030 = vmatpush1.bf16.msra.mxu0 0
      %1031 = vmatprep.subr.bf16.mxu0 0
      %1032 = vmatpush1.bf16.msra.mxu0 0
      %1033 = vmatprep.subr.bf16.mxu0 0
      %1034 = vmatpush1.bf16.msra.mxu0 0
      %1035 = vmatprep.subr.bf16.mxu0 0
      %1036 = vmatpush1.bf16.msra.mxu0 0
      %1037 = vmatprep.subr.bf16.mxu0 0
      %1038 = vmatpush1.bf16.msra.mxu0 0
      %1039 = vmatprep.subr.bf16.mxu0 0
      %1040 = vmatpush1.bf16.msra.mxu0 0
      %1041 = vmatprep.subr.bf16.mxu0 0
      %1042 = vmatpush1.bf16.msra.mxu0 0
      %1043 = vmatprep.subr.bf16.mxu0 0
      %1044 = vmatpush1.bf16.msra.mxu0 0
      %1045 = vmatprep.subr.bf16.mxu0 0
      %1046 = vmatpush1.bf16.msra.mxu0 0
      %1047 = vmatprep.subr.bf16.mxu0 0
      %1048 = vmatpush1.bf16.msra.mxu0 0
      %1049 = vmatprep.subr.bf16.mxu0 0
      %1050 = vmatpush1.bf16.msra.mxu0 0
      %1051 = vmatprep.subr.bf16.mxu0 0
      %1052 = vmatpush1.bf16.msra.mxu0 0
      %1053 = vmatprep.subr.bf16.mxu0 0
      %1054 = vmatpush1.bf16.msra.mxu0 0
      %1055 = vmatprep.mubr.bf16.mxu0 0
      %1056 = vmatmul.mubr.bf16.gmra.mrb[0].mxu0 %v1006
      %v1057 = vpop.f32.mrb[0].mxu0
      %v1058 = vadd.f32 0.0, %v1057
      %v1059 = vpop.f32.mrb[0].mxu0
      %v1060 = vpop.f32.mrb[0].mxu0
      %v1061 = vadd.f32 0.0, %v1060
      %v1062 = vpop.f32.mrb[0].mxu0
      %1063 = vmatprep.mubr.bf16.mxu0 0
      %1064 = vmatmul.mubr.bf16.gmra.mrb[0].mxu0 %v1009
      %v1065 = vpop.f32.mrb[0].mxu0
      %v1066 = vadd.f32 0.0, %v1065
      %v1067 = vpop.f32.mrb[0].mxu0
      %v1068 = vpop.f32.mrb[0].mxu0
      %v1069 = vadd.f32 0.0, %v1068
      %v1070 = vpop.f32.mrb[0].mxu0
      %1071 = vmatprep.mubr.bf16.mxu0 0
      %1072 = vmatmul.mubr.bf16.gmra.mrb[0].mxu0 %v1012
      %v1073 = vpop.f32.mrb[0].mxu0
      %v1074 = vadd.f32 0.0, %v1073
      %v1075 = vpop.f32.mrb[0].mxu0
      %v1076 = vpop.f32.mrb[0].mxu0
      %v1077 = vadd.f32 0.0, %v1076
      %v1078 = vpop.f32.mrb[0].mxu0
      %1079 = vmatprep.mubr.bf16.mxu0 0
      %1080 = vmatmul.mubr.bf16.gmra.mrb[0].mxu0 %v1015
      %v1081 = vpop.f32.mrb[0].mxu0
      %v1082 = vadd.f32 0.0, %v1081
      %v1083 = vpop.f32.mrb[0].mxu0
      %v1084 = vpop.f32.mrb[0].mxu0
      %v1085 = vadd.f32 0.0, %v1084
      %v1086 = vpop.f32.mrb[0].mxu0
      %1087 = vmatprep.mubr.bf16.mxu0 0
      %1088 = vmatmul.mubr.bf16.gmra.mrb[0].mxu0 %v1018
      %v1089 = vpop.f32.mrb[0].mxu0
      %v1090 = vadd.f32 0.0, %v1089
      %v1091 = vpop.f32.mrb[0].mxu0
      %v1092 = vpop.f32.mrb[0].mxu0
      %v1093 = vpop.f32.mrb[0].mxu0
      %1094 = vdwg.mxu0
      %v1095 = vadd.f32 %v962, %v1058
      %v1096 = vadd.f32 %v963, %v1061
      %v1097 = vadd.f32 %v964, %v1066
      %v1098 = vadd.f32 %v965, %v1069
      %v1099 = vadd.f32 %v966, %v1074
      %v1100 = vadd.f32 %v967, %v1077
      %v1101 = vadd.f32 %v968, %v1082
      %v1102 = vadd.f32 %v969, %v1085
      %v1103 = vadd.f32 %v970, %v1090
      %v1104 = vld [vmem:[%s395] sm:$0xf]
      %v1105 = vld [vmem:[%s395 + $0x4] sm:$0xf]
      %v1106 = vld [vmem:[%s395 + $0x8] sm:$0xf]
      %v1107 = vld [vmem:[%s395 + $0xc] sm:$0xf]
      %v1108 = vld [vmem:[%s395 + $0x10] sm:$0xf]
      %v1109 = vld [vmem:[%s395 + $0x14] sm:$0xf]
      %v1110 = vld [vmem:[%s395 + $0x18] sm:$0xf]
      %v1111 = vld [vmem:[%s395 + $0x1c] sm:$0xf]
      %v1112 = vld [vmem:[%s395 + $0x20] sm:$0xf]
      %v1113 = vld [vmem:[%s395 + $0x24] sm:$0x1]
      %s1114 = scalar_lea.vmem %s4, 10
      %v1115 = vld [vmem:[%s1114] sm:$0x3]
      %v1126 = vunpack.c.l.b16 %v1104
      %v1127 = vunpack.c.l.b16 %v1105
      %v1128 = vunpack.c.l.b16 %v1106
      %v1129 = vunpack.c.l.b16 %v1107
      %v1130 = vunpack.c.l.b16 %v1108
      %v1131 = vunpack.c.l.b16 %v1109
      %v1132 = vunpack.c.l.b16 %v1110
      %v1133 = vunpack.c.l.b16 %v1111
      %v1134 = vunpack.c.l.b16 %v1112
      %v1135 = vunpack.c.l.b16 %v1113
      %v1136 = vpack.c.b16 %v1127, %v1126
      %v1137 = vpack.c.b16 %v1129, %v1128
      %v1138 = vpack.c.b16 %v1131, %v1130
      %v1139 = vpack.c.b16 %v1133, %v1132
      %v1140 = vpack.c.b16 %v1135, %v1134
      %v1142 = vshrl.u32 %v1136, 16
      %v1144 = vshll.u32 %v1136, 16
      %v1146 = vrot.slane %v1144, 1
      %v1147 = vor.u32 %v1142, %v1146
      %v1149 = vshll.u32 %v1137, 16
      %v1151 = vrot.slane %v1149, 1
      %v1152 = vsel %vm699, %v1147, %v1151
      %v1153 = vshrl.u32 %v1137, 16
      %v1155 = vor.u32 %v1153, %v1151
      %v1157 = vshll.u32 %v1138, 16
      %v1159 = vrot.slane %v1157, 1
      %v1160 = vsel %vm699, %v1155, %v1159
      %v1161 = vshrl.u32 %v1138, 16
      %v1163 = vor.u32 %v1161, %v1159
      %v1165 = vshll.u32 %v1139, 16
      %v1167 = vrot.slane %v1165, 1
      %v1168 = vsel %vm699, %v1163, %v1167
      %v1169 = vshrl.u32 %v1139, 16
      %v1171 = vor.u32 %v1169, %v1167
      %v1173 = vshll.u32 %v1140, 16
      %v1175 = vrot.slane %v1173, 1
      %v1176 = vsel %vm699, %v1171, %v1175
      %v1177 = vshrl.u32 %v1140, 16
      %v1179 = vor.u32 %v1177, %v1175
      %v1181 = vsel %vm457, %v1152, 0
      %v1184 = vsel %vm457, %v1160, 0
      %v1187 = vsel %vm457, %v1168, 0
      %v1190 = vsel %vm457, %v1176, 0
      %v1193 = vsel %vm457, %v1179, 0
      %v1196 = vsel %vm473, %v1115, 0
      %1198 = vmatprep.subr.bf16.mxu0 0
      %1199 = vmatpush1.bf16.msra.mxu0 %v1196
      %1200 = vmatprep.subr.bf16.mxu0 0
      %1201 = vmatpush1.bf16.msra.mxu0 0
      %1202 = vmatprep.subr.bf16.mxu0 0
      %1203 = vmatpush1.bf16.msra.mxu0 0
      %1204 = vmatprep.subr.bf16.mxu0 0
      %1205 = vmatpush1.bf16.msra.mxu0 0
      %1206 = vmatprep.subr.bf16.mxu0 0
      %1207 = vmatpush1.bf16.msra.mxu0 0
      %1208 = vmatprep.subr.bf16.mxu0 0
      %1209 = vmatpush1.bf16.msra.mxu0 0
      %1210 = vmatprep.subr.bf16.mxu0 0
      %1211 = vmatpush1.bf16.msra.mxu0 0
      %1212 = vmatprep.subr.bf16.mxu0 0
      %1213 = vmatpush1.bf16.msra.mxu0 0
      %1214 = vmatprep.subr.bf16.mxu0 0
      %1215 = vmatpush1.bf16.msra.mxu0 0
      %1216 = vmatprep.subr.bf16.mxu0 0
      %1217 = vmatpush1.bf16.msra.mxu0 0
      %1218 = vmatprep.subr.bf16.mxu0 0
      %1219 = vmatpush1.bf16.msra.mxu0 0
      %1220 = vmatprep.subr.bf16.mxu0 0
      %1221 = vmatpush1.bf16.msra.mxu0 0
      %1222 = vmatprep.subr.bf16.mxu0 0
      %1223 = vmatpush1.bf16.msra.mxu0 0
      %1224 = vmatprep.subr.bf16.mxu0 0
      %1225 = vmatpush1.bf16.msra.mxu0 0
      %1226 = vmatprep.subr.bf16.mxu0 0
      %1227 = vmatpush1.bf16.msra.mxu0 0
      %1228 = vmatprep.subr.bf16.mxu0 0
      %1229 = vmatpush1.bf16.msra.mxu0 0
      %1230 = vmatprep.mubr.bf16.mxu0 0
      %1231 = vmatmul.mubr.bf16.gmra.mrb[0].mxu0 %v1181
      %v1232 = vpop.f32.mrb[0].mxu0
      %v1233 = vadd.f32 0.0, %v1232
      %v1234 = vpop.f32.mrb[0].mxu0
      %v1235 = vpop.f32.mrb[0].mxu0
      %v1236 = vadd.f32 0.0, %v1235
      %v1237 = vpop.f32.mrb[0].mxu0
      %1238 = vmatprep.mubr.bf16.mxu0 0
      %1239 = vmatmul.mubr.bf16.gmra.mrb[0].mxu0 %v1184
      %v1240 = vpop.f32.mrb[0].mxu0
      %v1241 = vadd.f32 0.0, %v1240
      %v1242 = vpop.f32.mrb[0].mxu0
      %v1243 = vpop.f32.mrb[0].mxu0
      %v1244 = vadd.f32 0.0, %v1243
      %v1245 = vpop.f32.mrb[0].mxu0
      %1246 = vmatprep.mubr.bf16.mxu0 0
      %1247 = vmatmul.mubr.bf16.gmra.mrb[0].mxu0 %v1187
      %v1248 = vpop.f32.mrb[0].mxu0
      %v1249 = vadd.f32 0.0, %v1248
      %v1250 = vpop.f32.mrb[0].mxu0
      %v1251 = vpop.f32.mrb[0].mxu0
      %v1252 = vadd.f32 0.0, %v1251
      %v1253 = vpop.f32.mrb[0].mxu0
      %1254 = vmatprep.mubr.bf16.mxu0 0
      %1255 = vmatmul.mubr.bf16.gmra.mrb[0].mxu0 %v1190
      %v1256 = vpop.f32.mrb[0].mxu0
      %v1257 = vadd.f32 0.0, %v1256
      %v1258 = vpop.f32.mrb[0].mxu0
      %v1259 = vpop.f32.mrb[0].mxu0
      %v1260 = vadd.f32 0.0, %v1259
      %v1261 = vpop.f32.mrb[0].mxu0
      %1262 = vmatprep.mubr.bf16.mxu0 0
      %1263 = vmatmul.mubr.bf16.gmra.mrb[0].mxu0 %v1193
      %v1264 = vpop.f32.mrb[0].mxu0
      %v1265 = vadd.f32 0.0, %v1264
      %v1266 = vpop.f32.mrb[0].mxu0
      %v1267 = vpop.f32.mrb[0].mxu0
      %v1268 = vpop.f32.mrb[0].mxu0
      %1269 = vdwg.mxu0
      %v1270 = vadd.f32 %v1095, %v1233
      %v1271 = vadd.f32 %v1096, %v1236
      %v1272 = vadd.f32 %v1097, %v1241
      %v1273 = vadd.f32 %v1098, %v1244
      %v1274 = vadd.f32 %v1099, %v1249
      %v1275 = vadd.f32 %v1100, %v1252
      %v1276 = vadd.f32 %v1101, %v1257
      %v1277 = vadd.f32 %v1102, %v1260
      %v1278 = vadd.f32 %v1103, %v1265
      %v1279 = vld [vmem:[%s377 + $0x4] sm:$0xf]
      %v1280 = vld [vmem:[%s377 + $0x8] sm:$0xf]
      %v1281 = vld [vmem:[%s377 + $0xc] sm:$0xf]
      %v1282 = vld [vmem:[%s377 + $0x10] sm:$0xf]
      %v1283 = vld [vmem:[%s377 + $0x14] sm:$0xf]
      %v1284 = vld [vmem:[%s377 + $0x18] sm:$0xf]
      %v1285 = vld [vmem:[%s377 + $0x1c] sm:$0xf]
      %v1286 = vld [vmem:[%s377 + $0x20] sm:$0xf]
      %v1287 = vld [vmem:[%s377 + $0x24] sm:$0xf]
      %v1288 = vld [vmem:[%s377 + $0x28] sm:$0x1]
      %s1289 = scalar_lea.vmem %s4, 12
      %v1290 = vld [vmem:[%s1289] sm:$0x3]
      %v1301 = vunpack.c.l.b16 %v1279
      %v1302 = vunpack.c.l.b16 %v1280
      %v1303 = vunpack.c.l.b16 %v1281
      %v1304 = vunpack.c.l.b16 %v1282
      %v1305 = vunpack.c.l.b16 %v1283
      %v1306 = vunpack.c.l.b16 %v1284
      %v1307 = vunpack.c.l.b16 %v1285
      %v1308 = vunpack.c.l.b16 %v1286
      %v1309 = vunpack.c.l.b16 %v1287
      %v1310 = vunpack.c.l.b16 %v1288
      %v1311 = vpack.c.b16 %v1302, %v1301
      %v1312 = vpack.c.b16 %v1304, %v1303
      %v1313 = vpack.c.b16 %v1306, %v1305
      %v1314 = vpack.c.b16 %v1308, %v1307
      %v1315 = vpack.c.b16 %v1310, %v1309
      %v1317 = vshrl.u32 %v1311, 16
      %v1319 = vshll.u32 %v1311, 16
      %v1321 = vrot.slane %v1319, 1
      %v1322 = vor.u32 %v1317, %v1321
      %v1324 = vshll.u32 %v1312, 16
      %v1326 = vrot.slane %v1324, 1
      %v1327 = vsel %vm699, %v1322, %v1326
      %v1328 = vshrl.u32 %v1312, 16
      %v1330 = vor.u32 %v1328, %v1326
      %v1332 = vshll.u32 %v1313, 16
      %v1334 = vrot.slane %v1332, 1
      %v1335 = vsel %vm699, %v1330, %v1334
      %v1336 = vshrl.u32 %v1313, 16
      %v1338 = vor.u32 %v1336, %v1334
      %v1340 = vshll.u32 %v1314, 16
      %v1342 = vrot.slane %v1340, 1
      %v1343 = vsel %vm699, %v1338, %v1342
      %v1344 = vshrl.u32 %v1314, 16
      %v1346 = vor.u32 %v1344, %v1342
      %v1348 = vshll.u32 %v1315, 16
      %v1350 = vrot.slane %v1348, 1
      %v1351 = vsel %vm699, %v1346, %v1350
      %v1352 = vshrl.u32 %v1315, 16
      %v1354 = vor.u32 %v1352, %v1350
      %v1356 = vsel %vm457, %v1327, 0
      %v1359 = vsel %vm457, %v1335, 0
      %v1362 = vsel %vm457, %v1343, 0
      %v1365 = vsel %vm457, %v1351, 0
      %v1368 = vsel %vm457, %v1354, 0
      %v1371 = vsel %vm473, %v1290, 0
      %1373 = vmatprep.subr.bf16.mxu0 0
      %1374 = vmatpush1.bf16.msra.mxu0 %v1371
      %1375 = vmatprep.subr.bf16.mxu0 0
      %1376 = vmatpush1.bf16.msra.mxu0 0
      %1377 = vmatprep.subr.bf16.mxu0 0
      %1378 = vmatpush1.bf16.msra.mxu0 0
      %1379 = vmatprep.subr.bf16.mxu0 0
      %1380 = vmatpush1.bf16.msra.mxu0 0
      %1381 = vmatprep.subr.bf16.mxu0 0
      %1382 = vmatpush1.bf16.msra.mxu0 0
      %1383 = vmatprep.subr.bf16.mxu0 0
      %1384 = vmatpush1.bf16.msra.mxu0 0
      %1385 = vmatprep.subr.bf16.mxu0 0
      %1386 = vmatpush1.bf16.msra.mxu0 0
      %1387 = vmatprep.subr.bf16.mxu0 0
      %1388 = vmatpush1.bf16.msra.mxu0 0
      %1389 = vmatprep.subr.bf16.mxu0 0
      %1390 = vmatpush1.bf16.msra.mxu0 0
      %1391 = vmatprep.subr.bf16.mxu0 0
      %1392 = vmatpush1.bf16.msra.mxu0 0
      %1393 = vmatprep.subr.bf16.mxu0 0
      %1394 = vmatpush1.bf16.msra.mxu0 0
      %1395 = vmatprep.subr.bf16.mxu0 0
      %1396 = vmatpush1.bf16.msra.mxu0 0
      %1397 = vmatprep.subr.bf16.mxu0 0
      %1398 = vmatpush1.bf16.msra.mxu0 0
      %1399 = vmatprep.subr.bf16.mxu0 0
      %1400 = vmatpush1.bf16.msra.mxu0 0
      %1401 = vmatprep.subr.bf16.mxu0 0
      %1402 = vmatpush1.bf16.msra.mxu0 0
      %1403 = vmatprep.subr.bf16.mxu0 0
      %1404 = vmatpush1.bf16.msra.mxu0 0
      %1405 = vmatprep.mubr.bf16.mxu0 0
      %1406 = vmatmul.mubr.bf16.gmra.mrb[0].mxu0 %v1356
      %v1407 = vpop.f32.mrb[0].mxu0
      %v1408 = vadd.f32 0.0, %v1407
      %v1409 = vpop.f32.mrb[0].mxu0
      %v1410 = vpop.f32.mrb[0].mxu0
      %v1411 = vadd.f32 0.0, %v1410
      %v1412 = vpop.f32.mrb[0].mxu0
      %1413 = vmatprep.mubr.bf16.mxu0 0
      %1414 = vmatmul.mubr.bf16.gmra.mrb[0].mxu0 %v1359
      %v1415 = vpop.f32.mrb[0].mxu0
      %v1416 = vadd.f32 0.0, %v1415
      %v1417 = vpop.f32.mrb[0].mxu0
      %v1418 = vpop.f32.mrb[0].mxu0
      %v1419 = vadd.f32 0.0, %v1418
      %v1420 = vpop.f32.mrb[0].mxu0
      %1421 = vmatprep.mubr.bf16.mxu0 0
      %1422 = vmatmul.mubr.bf16.gmra.mrb[0].mxu0 %v1362
      %v1423 = vpop.f32.mrb[0].mxu0
      %v1424 = vadd.f32 0.0, %v1423
      %v1425 = vpop.f32.mrb[0].mxu0
      %v1426 = vpop.f32.mrb[0].mxu0
      %v1427 = vadd.f32 0.0, %v1426
      %v1428 = vpop.f32.mrb[0].mxu0
      %1429 = vmatprep.mubr.bf16.mxu0 0
      %1430 = vmatmul.mubr.bf16.gmra.mrb[0].mxu0 %v1365
      %v1431 = vpop.f32.mrb[0].mxu0
      %v1432 = vadd.f32 0.0, %v1431
      %v1433 = vpop.f32.mrb[0].mxu0
      %v1434 = vpop.f32.mrb[0].mxu0
      %v1435 = vadd.f32 0.0, %v1434
      %v1436 = vpop.f32.mrb[0].mxu0
      %1437 = vmatprep.mubr.bf16.mxu0 0
      %1438 = vmatmul.mubr.bf16.gmra.mrb[0].mxu0 %v1368
      %v1439 = vpop.f32.mrb[0].mxu0
      %v1440 = vadd.f32 0.0, %v1439
      %v1441 = vpop.f32.mrb[0].mxu0
      %v1442 = vpop.f32.mrb[0].mxu0
      %v1443 = vpop.f32.mrb[0].mxu0
      %1444 = vdwg.mxu0
      %v1445 = vadd.f32 %v1270, %v1408
      %v1446 = vadd.f32 %v1271, %v1411
      %v1447 = vadd.f32 %v1272, %v1416
      %v1448 = vadd.f32 %v1273, %v1419
      %v1449 = vadd.f32 %v1274, %v1424
      %v1450 = vadd.f32 %v1275, %v1427
      %v1451 = vadd.f32 %v1276, %v1432
      %v1452 = vadd.f32 %v1277, %v1435
      %v1453 = vadd.f32 %v1278, %v1440
      %v1454 = vld [vmem:[%s386 + $0x4] sm:$0xf]
      %v1455 = vld [vmem:[%s386 + $0x8] sm:$0xf]
      %v1456 = vld [vmem:[%s386 + $0xc] sm:$0xf]
      %v1457 = vld [vmem:[%s386 + $0x10] sm:$0xf]
      %v1458 = vld [vmem:[%s386 + $0x14] sm:$0xf]
      %v1459 = vld [vmem:[%s386 + $0x18] sm:$0xf]
      %v1460 = vld [vmem:[%s386 + $0x1c] sm:$0xf]
      %v1461 = vld [vmem:[%s386 + $0x20] sm:$0xf]
      %v1462 = vld [vmem:[%s386 + $0x24] sm:$0xf]
      %v1463 = vld [vmem:[%s386 + $0x28] sm:$0x1]
      %s1464 = scalar_lea.vmem %s4, 14
      %v1465 = vld [vmem:[%s1464] sm:$0x3]
      %v1476 = vunpack.c.l.b16 %v1454
      %v1477 = vunpack.c.l.b16 %v1455
      %v1478 = vunpack.c.l.b16 %v1456
      %v1479 = vunpack.c.l.b16 %v1457
      %v1480 = vunpack.c.l.b16 %v1458
      %v1481 = vunpack.c.l.b16 %v1459
      %v1482 = vunpack.c.l.b16 %v1460
      %v1483 = vunpack.c.l.b16 %v1461
      %v1484 = vunpack.c.l.b16 %v1462
      %v1485 = vunpack.c.l.b16 %v1463
      %v1486 = vpack.c.b16 %v1477, %v1476
      %v1487 = vpack.c.b16 %v1479, %v1478
      %v1488 = vpack.c.b16 %v1481, %v1480
      %v1489 = vpack.c.b16 %v1483, %v1482
      %v1490 = vpack.c.b16 %v1485, %v1484
      %v1492 = vshrl.u32 %v1486, 16
      %v1494 = vshll.u32 %v1486, 16
      %v1496 = vrot.slane %v1494, 1
      %v1497 = vor.u32 %v1492, %v1496
      %v1499 = vshll.u32 %v1487, 16
      %v1501 = vrot.slane %v1499, 1
      %v1502 = vsel %vm699, %v1497, %v1501
      %v1503 = vshrl.u32 %v1487, 16
      %v1505 = vor.u32 %v1503, %v1501
      %v1507 = vshll.u32 %v1488, 16
      %v1509 = vrot.slane %v1507, 1
      %v1510 = vsel %vm699, %v1505, %v1509
      %v1511 = vshrl.u32 %v1488, 16
      %v1513 = vor.u32 %v1511, %v1509
      %v1515 = vshll.u32 %v1489, 16
      %v1517 = vrot.slane %v1515, 1
      %v1518 = vsel %vm699, %v1513, %v1517
      %v1519 = vshrl.u32 %v1489, 16
      %v1521 = vor.u32 %v1519, %v1517
      %v1523 = vshll.u32 %v1490, 16
      %v1525 = vrot.slane %v1523, 1
      %v1526 = vsel %vm699, %v1521, %v1525
      %v1527 = vshrl.u32 %v1490, 16
      %v1529 = vor.u32 %v1527, %v1525
      %v1531 = vsel %vm457, %v1502, 0
      %v1534 = vsel %vm457, %v1510, 0
      %v1537 = vsel %vm457, %v1518, 0
      %v1540 = vsel %vm457, %v1526, 0
      %v1543 = vsel %vm457, %v1529, 0
      %v1546 = vsel %vm473, %v1465, 0
      %1548 = vmatprep.subr.bf16.mxu0 0
      %1549 = vmatpush1.bf16.msra.mxu0 %v1546
      %1550 = vmatprep.subr.bf16.mxu0 0
      %1551 = vmatpush1.bf16.msra.mxu0 0
      %1552 = vmatprep.subr.bf16.mxu0 0
      %1553 = vmatpush1.bf16.msra.mxu0 0
      %1554 = vmatprep.subr.bf16.mxu0 0
      %1555 = vmatpush1.bf16.msra.mxu0 0
      %1556 = vmatprep.subr.bf16.mxu0 0
      %1557 = vmatpush1.bf16.msra.mxu0 0
      %1558 = vmatprep.subr.bf16.mxu0 0
      %1559 = vmatpush1.bf16.msra.mxu0 0
      %1560 = vmatprep.subr.bf16.mxu0 0
      %1561 = vmatpush1.bf16.msra.mxu0 0
      %1562 = vmatprep.subr.bf16.mxu0 0
      %1563 = vmatpush1.bf16.msra.mxu0 0
      %1564 = vmatprep.subr.bf16.mxu0 0
      %1565 = vmatpush1.bf16.msra.mxu0 0
      %1566 = vmatprep.subr.bf16.mxu0 0
      %1567 = vmatpush1.bf16.msra.mxu0 0
      %1568 = vmatprep.subr.bf16.mxu0 0
      %1569 = vmatpush1.bf16.msra.mxu0 0
      %1570 = vmatprep.subr.bf16.mxu0 0
      %1571 = vmatpush1.bf16.msra.mxu0 0
      %1572 = vmatprep.subr.bf16.mxu0 0
      %1573 = vmatpush1.bf16.msra.mxu0 0
      %1574 = vmatprep.subr.bf16.mxu0 0
      %1575 = vmatpush1.bf16.msra.mxu0 0
      %1576 = vmatprep.subr.bf16.mxu0 0
      %1577 = vmatpush1.bf16.msra.mxu0 0
      %1578 = vmatprep.subr.bf16.mxu0 0
      %1579 = vmatpush1.bf16.msra.mxu0 0
      %1580 = vmatprep.mubr.bf16.mxu0 0
      %1581 = vmatmul.mubr.bf16.gmra.mrb[0].mxu0 %v1531
      %v1582 = vpop.f32.mrb[0].mxu0
      %v1583 = vadd.f32 0.0, %v1582
      %v1584 = vpop.f32.mrb[0].mxu0
      %v1585 = vpop.f32.mrb[0].mxu0
      %v1586 = vadd.f32 0.0, %v1585
      %v1587 = vpop.f32.mrb[0].mxu0
      %1588 = vmatprep.mubr.bf16.mxu0 0
      %1589 = vmatmul.mubr.bf16.gmra.mrb[0].mxu0 %v1534
      %v1590 = vpop.f32.mrb[0].mxu0
      %v1591 = vadd.f32 0.0, %v1590
      %v1592 = vpop.f32.mrb[0].mxu0
      %v1593 = vpop.f32.mrb[0].mxu0
      %v1594 = vadd.f32 0.0, %v1593
      %v1595 = vpop.f32.mrb[0].mxu0
      %1596 = vmatprep.mubr.bf16.mxu0 0
      %1597 = vmatmul.mubr.bf16.gmra.mrb[0].mxu0 %v1537
      %v1598 = vpop.f32.mrb[0].mxu0
      %v1599 = vadd.f32 0.0, %v1598
      %v1600 = vpop.f32.mrb[0].mxu0
      %v1601 = vpop.f32.mrb[0].mxu0
      %v1602 = vadd.f32 0.0, %v1601
      %v1603 = vpop.f32.mrb[0].mxu0
      %1604 = vmatprep.mubr.bf16.mxu0 0
      %1605 = vmatmul.mubr.bf16.gmra.mrb[0].mxu0 %v1540
      %v1606 = vpop.f32.mrb[0].mxu0
      %v1607 = vadd.f32 0.0, %v1606
      %v1608 = vpop.f32.mrb[0].mxu0
      %v1609 = vpop.f32.mrb[0].mxu0
      %v1610 = vadd.f32 0.0, %v1609
      %v1611 = vpop.f32.mrb[0].mxu0
      %1612 = vmatprep.mubr.bf16.mxu0 0
      %1613 = vmatmul.mubr.bf16.gmra.mrb[0].mxu0 %v1543
      %v1614 = vpop.f32.mrb[0].mxu0
      %v1615 = vadd.f32 0.0, %v1614
      %v1616 = vpop.f32.mrb[0].mxu0
      %v1617 = vpop.f32.mrb[0].mxu0
      %v1618 = vpop.f32.mrb[0].mxu0
      %1619 = vdwg.mxu0
      %v1620 = vadd.f32 %v1445, %v1583
      %v1621 = vadd.f32 %v1446, %v1586
      %v1622 = vadd.f32 %v1447, %v1591
      %v1623 = vadd.f32 %v1448, %v1594
      %v1624 = vadd.f32 %v1449, %v1599
      %v1625 = vadd.f32 %v1450, %v1602
      %v1626 = vadd.f32 %v1451, %v1607
      %v1627 = vadd.f32 %v1452, %v1610
      %v1628 = vadd.f32 %v1453, %v1615
      %v1629 = vld [vmem:[%s377 + $0x4] sm:$0xe]
      %s1630 = scalar_lea.vmem %s4, 16
      %v1631 = vld [vmem:[%s1630] sm:$0x3]
      %v1633 = vunpack.c.l.b16 %v1629
      %v1634 = vpack.c.b16 %v1302, %v1633
      %vm1635 = vcmask 1046528
      %v1636 = vrot.slane %v1634, 1
      %v1637 = vrot.slane %v1312, 1
      %v1638 = vsel %vm1635, %v1636, %v1637
      %v1639 = vrot.slane %v1313, 1
      %v1640 = vsel %vm1635, %v1637, %v1639
      %v1641 = vrot.slane %v1314, 1
      %v1642 = vsel %vm1635, %v1639, %v1641
      %v1643 = vrot.slane %v1315, 1
      %v1644 = vsel %vm1635, %v1641, %v1643
      %v1646 = vsel %vm457, %v1638, 0
      %v1649 = vsel %vm457, %v1640, 0
      %v1652 = vsel %vm457, %v1642, 0
      %v1655 = vsel %vm457, %v1644, 0
      %v1658 = vsel %vm457, %v1643, 0
      %v1661 = vsel %vm473, %v1631, 0
      %1663 = vmatprep.subr.bf16.mxu0 0
      %1664 = vmatpush1.bf16.msra.mxu0 %v1661
      %1665 = vmatprep.subr.bf16.mxu0 0
      %1666 = vmatpush1.bf16.msra.mxu0 0
      %1667 = vmatprep.subr.bf16.mxu0 0
      %1668 = vmatpush1.bf16.msra.mxu0 0
      %1669 = vmatprep.subr.bf16.mxu0 0
      %1670 = vmatpush1.bf16.msra.mxu0 0
      %1671 = vmatprep.subr.bf16.mxu0 0
      %1672 = vmatpush1.bf16.msra.mxu0 0
      %1673 = vmatprep.subr.bf16.mxu0 0
      %1674 = vmatpush1.bf16.msra.mxu0 0
      %1675 = vmatprep.subr.bf16.mxu0 0
      %1676 = vmatpush1.bf16.msra.mxu0 0
      %1677 = vmatprep.subr.bf16.mxu0 0
      %1678 = vmatpush1.bf16.msra.mxu0 0
      %1679 = vmatprep.subr.bf16.mxu0 0
      %1680 = vmatpush1.bf16.msra.mxu0 0
      %1681 = vmatprep.subr.bf16.mxu0 0
      %1682 = vmatpush1.bf16.msra.mxu0 0
      %1683 = vmatprep.subr.bf16.mxu0 0
      %1684 = vmatpush1.bf16.msra.mxu0 0
      %1685 = vmatprep.subr.bf16.mxu0 0
      %1686 = vmatpush1.bf16.msra.mxu0 0
      %1687 = vmatprep.subr.bf16.mxu0 0
      %1688 = vmatpush1.bf16.msra.mxu0 0
      %1689 = vmatprep.subr.bf16.mxu0 0
      %1690 = vmatpush1.bf16.msra.mxu0 0
      %1691 = vmatprep.subr.bf16.mxu0 0
      %1692 = vmatpush1.bf16.msra.mxu0 0
      %1693 = vmatprep.subr.bf16.mxu0 0
      %1694 = vmatpush1.bf16.msra.mxu0 0
      %1695 = vmatprep.mubr.bf16.mxu0 0
      %1696 = vmatmul.mubr.bf16.gmra.mrb[0].mxu0 %v1646
      %v1697 = vpop.f32.mrb[0].mxu0
      %v1698 = vadd.f32 0.0, %v1697
      %v1699 = vpop.f32.mrb[0].mxu0
      %v1700 = vpop.f32.mrb[0].mxu0
      %v1701 = vadd.f32 0.0, %v1700
      %v1702 = vpop.f32.mrb[0].mxu0
      %1703 = vmatprep.mubr.bf16.mxu0 0
      %1704 = vmatmul.mubr.bf16.gmra.mrb[0].mxu0 %v1649
      %v1705 = vpop.f32.mrb[0].mxu0
      %v1706 = vadd.f32 0.0, %v1705
      %v1707 = vpop.f32.mrb[0].mxu0
      %v1708 = vpop.f32.mrb[0].mxu0
      %v1709 = vadd.f32 0.0, %v1708
      %v1710 = vpop.f32.mrb[0].mxu0
      %1711 = vmatprep.mubr.bf16.mxu0 0
      %1712 = vmatmul.mubr.bf16.gmra.mrb[0].mxu0 %v1652
      %v1713 = vpop.f32.mrb[0].mxu0
      %v1714 = vadd.f32 0.0, %v1713
      %v1715 = vpop.f32.mrb[0].mxu0
      %v1716 = vpop.f32.mrb[0].mxu0
      %v1717 = vadd.f32 0.0, %v1716
      %v1718 = vpop.f32.mrb[0].mxu0
      %1719 = vmatprep.mubr.bf16.mxu0 0
      %1720 = vmatmul.mubr.bf16.gmra.mrb[0].mxu0 %v1655
      %v1721 = vpop.f32.mrb[0].mxu0
      %v1722 = vadd.f32 0.0, %v1721
      %v1723 = vpop.f32.mrb[0].mxu0
      %v1724 = vpop.f32.mrb[0].mxu0
      %v1725 = vadd.f32 0.0, %v1724
      %v1726 = vpop.f32.mrb[0].mxu0
      %1727 = vmatprep.mubr.bf16.mxu0 0
      %1728 = vmatmul.mubr.bf16.gmra.mrb[0].mxu0 %v1658
      %v1729 = vpop.f32.mrb[0].mxu0
      %v1730 = vadd.f32 0.0, %v1729
      %v1731 = vpop.f32.mrb[0].mxu0
      %v1732 = vpop.f32.mrb[0].mxu0
      %v1733 = vpop.f32.mrb[0].mxu0
      %1734 = vdwg.mxu0
      %v1735 = vadd.f32 %v1620, %v1698
      %v1736 = vadd.f32 %v1621, %v1701
      %v1737 = vadd.f32 %v1622, %v1706
      %v1738 = vadd.f32 %v1623, %v1709
      %v1739 = vadd.f32 %v1624, %v1714
      %v1740 = vadd.f32 %v1625, %v1717
      %v1741 = vadd.f32 %v1626, %v1722
      %v1742 = vadd.f32 %v1627, %v1725
      %v1743 = vadd.f32 %v1628, %v1730
      %v1744 = vld [vmem:[%s5] sm:$0x1]
      %v1746 = vlaneseq
      %v1747 = vshrl.u32 %v1746, 7
      %v1748 = vsub.s32 0, %v1747
      %v1749 = vrot.slane %v1744, %v1748
      %v1751 = vmul.f32 %v1735, %v1749
      %v1752 = vmul.f32 %v1736, %v1749
      %v1753 = vmul.f32 %v1737, %v1749
      %v1754 = vmul.f32 %v1738, %v1749
      %v1755 = vmul.f32 %v1739, %v1749
      %v1756 = vmul.f32 %v1740, %v1749
      %v1757 = vmul.f32 %v1741, %v1749
      %v1758 = vmul.f32 %v1742, %v1749
      %v1759 = vmul.f32 %v1743, %v1749
      %v1760 = vld [vmem:[%s6] sm:$0x1]
      %v1762 = vlaneseq
      %v1763 = vshrl.u32 %v1762, 7
      %v1764 = vsub.s32 0, %v1763
      %v1765 = vrot.slane %v1760, %v1764
      %v1767 = vadd.f32 %v1751, %v1765
      %v1768 = vadd.f32 %v1752, %v1765
      %v1769 = vadd.f32 %v1753, %v1765
      %v1770 = vadd.f32 %v1754, %v1765
      %v1771 = vadd.f32 %v1755, %v1765
      %v1772 = vadd.f32 %v1756, %v1765
      %v1773 = vadd.f32 %v1757, %v1765
      %v1774 = vadd.f32 %v1758, %v1765
      %v1775 = vadd.f32 %v1759, %v1765
      %vm1776 = vcmp.ge.f32.partialorder %v1767, 0.0
      %vm1777 = vcmp.ge.f32.partialorder %v1768, 0.0
      %vm1778 = vcmp.ge.f32.partialorder %v1769, 0.0
      %vm1779 = vcmp.ge.f32.partialorder %v1770, 0.0
      %vm1780 = vcmp.ge.f32.partialorder %v1771, 0.0
      %vm1781 = vcmp.ge.f32.partialorder %v1772, 0.0
      %vm1782 = vcmp.ge.f32.partialorder %v1773, 0.0
      %vm1783 = vcmp.ge.f32.partialorder %v1774, 0.0
      %vm1784 = vcmp.ge.f32.partialorder %v1775, 0.0
      %v1785 = vmul.f32 %v1767, 0.1
      %v1786 = vmul.f32 %v1768, 0.1
      %v1787 = vmul.f32 %v1769, 0.1
      %v1788 = vmul.f32 %v1770, 0.1
      %v1789 = vmul.f32 %v1771, 0.1
      %v1790 = vmul.f32 %v1772, 0.1
      %v1791 = vmul.f32 %v1773, 0.1
      %v1792 = vmul.f32 %v1774, 0.1
      %v1793 = vmul.f32 %v1775, 0.1
      %v1794 = vsel %vm1776, %v1767, %v1785
      %v1795 = vsel %vm1777, %v1768, %v1786
      %v1796 = vsel %vm1778, %v1769, %v1787
      %v1797 = vsel %vm1779, %v1770, %v1788
      %v1798 = vsel %vm1780, %v1771, %v1789
      %v1799 = vsel %vm1781, %v1772, %v1790
      %v1800 = vsel %vm1782, %v1773, %v1791
      %v1801 = vsel %vm1783, %v1774, %v1792
      %v1802 = vsel %vm1784, %v1775, %v1793
      %1803 = vst [vmem:[%s410] sm:$0xff] %v1794
      %1804 = vst [vmem:[%s410 + $0x8] sm:$0xff] %v1795
      %1805 = vst [vmem:[%s410 + $0x10] sm:$0xff] %v1796
      %1806 = vst [vmem:[%s410 + $0x18] sm:$0xff] %v1797
      %1807 = vst [vmem:[%s410 + $0x20] sm:$0xff] %v1798
      %1808 = vst [vmem:[%s410 + $0x28] sm:$0xff] %v1799
      %1809 = vst [vmem:[%s410 + $0x30] sm:$0xff] %v1800
      %1810 = vst [vmem:[%s410 + $0x38] sm:$0xff] %v1801
      %1811 = vst [vmem:[%s410 + $0x40] sm:$0xff] %v1802
      %s1812 = sadd.s32 %s22, %s23
      %p1813 = scmp.lt.s32.totalorder %s1812, 1
      %s1814 = scalar_select %p1813, %s1812, 1
      %s1815 = smul.addr %s1814, 9
      %s1816 = smul.addr %s1815, 8
      %s1817 = scalar_lea.vmem %s7, %s1816
      // Predicated region
      $region49: #{downsample_forward.1} parent=47 // pred_check
        %p1818 = pneg %p225
      $region50: #{downsample_forward.1} parent=47 // pred_check_branch
        %1820 = sbr.rel (%p1818) target = $region52
      $region51: #{downsample_forward.1} parent=47 // pred_region
        %s1821 = sadd.s32 %s22, %s23
      $region52: #{downsample_forward.1} parent=47 // pred_fallthru
        _
    $region48: #{downsample_forward.1} parent=5 // pred_fallthru
      _
    %p1822 = scmp.le.s32.totalorder 2, %s13
    // Predicated region
    $region53: #{downsample_forward.1} parent=5 // pred_check
      %p1823 = pneg %p1822
    $region54: #{downsample_forward.1} parent=5 // pred_check_branch
      %1825 = sbr.rel (%p1823) target = $region56
    $region55: #{downsample_forward.1} parent=5 // pred_region
      %s1826 = ssub.s32 %s13, 2
      // Predicated region
      $region57: #{downsample_forward.1} parent=55 // pred_check
        %p1827 = pneg %p231
      $region58: #{downsample_forward.1} parent=55 // pred_check_branch
        %1829 = sbr.rel (%p1827) target = $region60
      $region59: #{downsample_forward.1} parent=55 // pred_region
        %s1830 = sadd.s32 %s24, %s25
        %p1831 = scmp.lt.s32.totalorder %s1830, 1
        %s1832 = scalar_select %p1831, %s1830, 1
        %s1833 = smul.addr %s1832, 9
        %s1834 = smul.addr %s1833, 8
        %s1835 = scalar_lea.vmem %s7, %s1834
      $region60: #{downsample_forward.1} parent=55 // pred_fallthru
        _
    $region56: #{downsample_forward.1} parent=5 // pred_fallthru
      _
  $region6: #{downsample_forward.1} parent=0 // loop_footer
    %s17 = sadd.s32 1, %s13
  $region7: #{downsample_forward.1} parent=0 // loop_footer_branch
    %12 = sbr.rel target = $region3
  $region8: #{downsample_forward.1} parent=0 // loop_exit
    _

</llo_original>
